<compile_context>
chip_gen: v7x
topology: tpu7x:2x2x1
jax: 0.10.0
libtpu: 0.0.40
codegen_flags: <defaults>
</compile_context>

<pallas_src>
import math
import functools
import jax
import jax.numpy as jnp
from jax.experimental import pallas as pl
from jax.experimental.pallas import tpu as pltpu

_BN_EPS = 1e-5
_BN_SCALE = 1.0 / math.sqrt(1.0 + _BN_EPS)


def _round_up(x, m):
    return (x + m - 1) // m * m


def _deepfm_kernel(emb_ref, fvw_ref, R_ref, S_ref, M_ref,
                   b1_ref, W2_ref, b2_ref, W3_ref, b3_ref,
                   wfc1_ref, wfc2_ref, wfc3_ref, bfc_ref,
                   out_ref, *, num_field, emb_size, w1_off, l1):
    fvw = fvw_ref[...]                                    # (TB, 2F) f32 packed
    fv = fvw[:, :num_field]                               # (TB, F) feat_value
    w1g = fvw[:, num_field:]                              # (TB, F) 1st-order w

    # Expand feat_value across each field's E-wide lane block with an f32
    # 0/1 matmul (K=F, negligible MXU cost; keeps feat_value exact).
    fv_exp = jnp.dot(fv, R_ref[...], preferred_element_type=jnp.float32)
    fev = emb_ref[...].astype(jnp.float32) * fv_exp       # (TB, F*E) f32
    fev_bf = fev.astype(jnp.bfloat16)

    # ---- FM first order: sum_e(first_weights * value) == elementwise product.
    y_first = w1g * fv                                    # (TB, F) f32

    # ---- fused bf16 matmul: [FM field sums | first deep layer pre-act].
    merged = jnp.dot(fev_bf, M_ref[...], preferred_element_type=jnp.float32)
    summed = merged[:, :emb_size]                         # (TB, E)
    h = merged[:, w1_off:w1_off + l1] + b1_ref[...]       # (TB, L1)
    h = jnp.maximum(h, 0.0)

    # ---- FM second order (square / subtract kept in f32 for cancellation).
    sq_sum = jnp.dot((fev * fev).astype(jnp.bfloat16), S_ref[...],
                     preferred_element_type=jnp.float32)  # (TB, E)
    y_secd = 0.5 * (summed * summed - sq_sum)             # (TB, E)

    # ---- remaining deep MLP (bf16 operands, f32 accumulate, BN eval-scale
    # pre-folded into W/b, Dropout = identity).
    h = jnp.dot(h.astype(jnp.bfloat16), W2_ref[...],
                preferred_element_type=jnp.float32) + b2_ref[...]
    h = jnp.maximum(h, 0.0)
    h = jnp.dot(h.astype(jnp.bfloat16), W3_ref[...],
                preferred_element_type=jnp.float32) + b3_ref[...]
    h = jnp.maximum(h, 0.0)

    # ---- Final fc over concat([y_first, y_secd, h]) as split lane reductions
    # (kept on the XLU on purpose -- MXU is the binding unit).
    out = (jnp.sum(y_first * wfc1_ref[...], axis=1, keepdims=True)
           + jnp.sum(y_secd * wfc2_ref[...], axis=1, keepdims=True)
           + jnp.sum(h * wfc3_ref[...], axis=1, keepdims=True)
           + bfc_ref[...])
    out_ref[...] = out.astype(out_ref.dtype)


def deepfm_forward(feat_index, feat_value, first_w_table, emb_table,
                   Ws, bs, wfc, bfc, *, block_batch=1024):
    B, num_field = feat_value.shape
    emb_size = emb_table.shape[1]
    fe = num_field * emb_size
    l1 = Ws[0].shape[1]

    # Glue: data-dependent embedding-table gathers stay in plain JAX, gathered
    # straight into the lane-dense flat (B, F*E) layout, already cast to bf16
    # so the dominant HBM slab is half-width.
    # TODO(synk): fuse the gather into the kernel (scalar-prefetched feat_index
    # + DMA/take row gather) to remove the HBM round trip of the slab entirely.
    emb_flat = emb_table.astype(jnp.bfloat16)[feat_index].reshape(B, fe)
    w1g = first_w_table[feat_index, 0]                    # (B, F)
    fvw = jnp.concatenate([feat_value.astype(jnp.float32), w1g], axis=1)

    # Fold the eval-mode BatchNorm scale into the linear layers:
    # relu((h@W + b) * c) == relu(h@(cW) + cb).
    c = jnp.float32(_BN_SCALE)
    W1, W2, W3 = Ws[0] * c, Ws[1] * c, Ws[2] * c
    b1, b2, b3 = bs[0] * c, bs[1] * c, bs[2] * c

    # Split the fc weight according to the concat layout (first, second, deep).
    wfc1 = wfc[:num_field, 0][None, :]                        # (1, F)
    wfc2 = wfc[num_field:num_field + emb_size, 0][None, :]    # (1, E)
    wfc3 = wfc[num_field + emb_size:, 0][None, :]             # (1, L3)

    # Constant 0/1 helper matrices (resident in VMEM):
    #   R (F, F*E) f32 : expands a per-field scalar across its E-wide lane block.
    #   S (F*E, E) bf16: sums the F fields of a flat row back down to (E,).
    k = jnp.arange(fe)
    R = (k[None, :] // emb_size == jnp.arange(num_field)[:, None]).astype(jnp.float32)
    S = (k[:, None] % emb_size == jnp.arange(emb_size)[None, :]).astype(jnp.float32)

    # Merged RHS [S | 0 | W1] (bf16); W1 aligned to a 64-lane boundary so the
    # in-kernel result slices are cheap.
    w1_off = _round_up(emb_size, 64)
    nm = _round_up(w1_off + l1, 128)
    M = jnp.zeros((fe, nm), jnp.float32)
    M = M.at[:, :emb_size].set(S)
    M = M.at[:, w1_off:w1_off + l1].set(W1)

    S_bf = S.astype(jnp.bfloat16)
    M_bf = M.astype(jnp.bfloat16)
    W2_bf = W2.astype(jnp.bfloat16)
    W3_bf = W3.astype(jnp.bfloat16)

    # Batch tiling: sublane-aligned tile, >=2 grid steps when possible (v7x has
    # 2 TensorCores), ragged tail padded and sliced off after the kernel.
    tb = max(8, min(block_batch, _round_up(B, 8)))
    tb = _round_up(tb, 8)
    if B > 8 and pl.cdiv(B, tb) < 2:
        tb = _round_up(pl.cdiv(B, 2), 8)
    bp = _round_up(B, tb)
    if bp != B:
        pad = bp - B
        emb_flat = jnp.pad(emb_flat, ((0, pad), (0, 0)))
        fvw = jnp.pad(fvw, ((0, pad), (0, 0)))
    grid = (bp // tb,)

    # VMEM budget sized to the chosen tile (double-buffered streams + resident
    # weights), with headroom for intermediates.
    lane = 128

    def _padded_bytes(rows, cols, itemsize):
        return rows * _round_up(cols, lane) * itemsize

    resident_bytes = (_padded_bytes(*R.shape, 4) + _padded_bytes(*S_bf.shape, 2)
                      + _padded_bytes(*M_bf.shape, 2) + _padded_bytes(*W2_bf.shape, 2)
                      + _padded_bytes(*W3_bf.shape, 2)
                      + _padded_bytes(*b1.shape, 4) + _padded_bytes(*b2.shape, 4)
                      + _padded_bytes(*b3.shape, 4) + _padded_bytes(*wfc1.shape, 4)
                      + _padded_bytes(*wfc2.shape, 4) + _padded_bytes(*wfc3.shape, 4)
                      + _padded_bytes(*bfc.shape, 4))
    tile_bytes = (_padded_bytes(tb, fe, 2) + _padded_bytes(tb, 2 * num_field, 4)
                  + _padded_bytes(tb, 1, 4))
    vmem_limit = int(min(max(4 * (2 * tile_bytes + 2 * resident_bytes), 16 << 20),
                         48 << 20))

    def batch_spec(cols):
        return pl.BlockSpec((tb, cols), lambda i: (i, 0))

    def resident(arr):
        # Constant index_map -> DMA'd once, stays resident across grid steps.
        # TODO(synk): pipeline_mode=pl.Buffered(1) would also drop the unused
        # second buffer for these small resident weights.
        return pl.BlockSpec(arr.shape, lambda i: (0, 0))

    kernel = functools.partial(_deepfm_kernel, num_field=num_field,
                               emb_size=emb_size, w1_off=w1_off, l1=l1)

    in_specs = [
        batch_spec(fe),                 # emb_flat (bf16, lane-dense)
        batch_spec(2 * num_field),      # packed [feat_value | first-order w]
        resident(R), resident(S_bf), resident(M_bf),
        resident(b1), resident(W2_bf), resident(b2),
        resident(W3_bf), resident(b3),
        resident(wfc1), resident(wfc2), resident(wfc3), resident(bfc),
    ]
    out_specs = pl.BlockSpec((tb, 1), lambda i: (i, 0))

    out = pl.pallas_call(
        kernel,
        out_shape=jax.ShapeDtypeStruct((bp, 1), jnp.float32),
        grid=grid,
        in_specs=in_specs,
        out_specs=out_specs,
        compiler_params=pltpu.CompilerParams(
            dimension_semantics=("parallel",),
            vmem_limit_bytes=vmem_limit),
    )(emb_flat, fvw, R, S_bf, M_bf, b1, W2_bf, b2, W3_bf, b3,
      wfc1, wfc2, wfc3, bfc)
    return out[:B]


def deepfm_ref(feat_index, feat_value, first_w_table, emb_table, Ws, bs, wfc, bfc):
    hp = jax.lax.Precision.HIGHEST
    fv = feat_value[:, :, None]
    y_first = jnp.sum(first_w_table[feat_index] * fv, axis=2)
    fev = emb_table[feat_index] * fv
    summed = jnp.sum(fev, axis=1)
    y_secd = 0.5 * (summed ** 2 - jnp.sum(fev ** 2, axis=1))
    h = fev.reshape(fev.shape[0], -1)
    for W, b in zip(Ws, bs):
        h = jnp.maximum((jnp.dot(h, W, precision=hp) + b) * _BN_SCALE, 0.0)
    concat = jnp.concatenate([y_first, y_secd, h], axis=1)
    return jnp.dot(concat, wfc, precision=hp) + bfc


if __name__ == "__main__":
    B, num_feat, num_field, emb_size = 256, 64, 8, 16
    layer_sizes = [64, 64, 64]

    key = jax.random.PRNGKey(0)
    keys = jax.random.split(key, 12)

    feat_index = jax.random.randint(keys[0], (B, num_field), 0, num_feat)
    feat_value = jax.random.normal(keys[1], (B, num_field), jnp.float32)

    def xavier(k, shape):
        limit = math.sqrt(6.0 / (shape[0] + shape[1]))
        return jax.random.uniform(k, shape, jnp.float32, -limit, limit)

    first_w_table = xavier(keys[2], (num_feat, 1))
    emb_table = xavier(keys[3], (num_feat, emb_size))

    all_dims = [num_field * emb_size] + layer_sizes
    Ws, bs = [], []
    for i in range(len(layer_sizes)):
        Ws.append(xavier(keys[4 + i], (all_dims[i], all_dims[i + 1])))      # (in, out)
        bs.append(jax.random.uniform(keys[7 + i], (1, all_dims[i + 1]),
                                     jnp.float32, -0.1, 0.1))
    fc_in = num_field + emb_size + all_dims[-1]
    wfc = xavier(keys[10], (fc_in, 1))
    bfc = jax.random.uniform(keys[11], (1, 1), jnp.float32, -0.1, 0.1)

    out = deepfm_forward(feat_index, feat_value, first_w_table, emb_table,
                         Ws, bs, wfc, bfc)
    out = jax.block_until_ready(out)

    ref = deepfm_ref(feat_index, feat_value, first_w_table, emb_table,
                     Ws, bs, wfc, bfc)
    assert out.shape == (B, 1)
    # bf16 MXU operands (f32 accumulation) -> bf16-level tolerance vs f32 ref.
    assert jnp.allclose(out, ref, rtol=2e-2, atol=3e-2), \
        float(jnp.max(jnp.abs(out - ref)))
    print("KERNEL_OK")
</pallas_src>

<mosaic_0001>
module attributes {stable_mosaic.version = 11 : i64} {
  func.func @_deepfm_kernel(%arg0: i32, %arg1: memref<128x128xbf16, #tpu.memory_space<vmem>>, %arg2: memref<128x16xf32, #tpu.memory_space<vmem>>, %arg3: memref<8x128xf32, #tpu.memory_space<vmem>>, %arg4: memref<128x16xbf16, #tpu.memory_space<vmem>>, %arg5: memref<128x128xbf16, #tpu.memory_space<vmem>>, %arg6: memref<1x64xf32, #tpu.memory_space<vmem>>, %arg7: memref<64x64xbf16, #tpu.memory_space<vmem>>, %arg8: memref<1x64xf32, #tpu.memory_space<vmem>>, %arg9: memref<64x64xbf16, #tpu.memory_space<vmem>>, %arg10: memref<1x64xf32, #tpu.memory_space<vmem>>, %arg11: memref<1x8xf32, #tpu.memory_space<vmem>>, %arg12: memref<1x16xf32, #tpu.memory_space<vmem>>, %arg13: memref<1x64xf32, #tpu.memory_space<vmem>>, %arg14: memref<1x1xf32, #tpu.memory_space<vmem>>, %arg15: memref<128x1xf32, #tpu.memory_space<vmem>>) attributes {dimension_semantics = [#tpu.dimension_semantics<parallel>], iteration_bounds = array<i64: 2>, scalar_prefetch = 0 : i64, scratch_operands = 0 : i64, tpu.core_type = #tpu.core_type<tc>, window_params = [{transform_indices = @transform_0, window_bounds = array<i64: 128, 128>}, {transform_indices = @transform_1, window_bounds = array<i64: 128, 16>}, {pipeline_mode = #tpu.pipeline_mode<synchronous>, transform_indices = @transform_2, window_bounds = array<i64: 8, 128>}, {pipeline_mode = #tpu.pipeline_mode<synchronous>, transform_indices = @transform_3, window_bounds = array<i64: 128, 16>}, {pipeline_mode = #tpu.pipeline_mode<synchronous>, transform_indices = @transform_4, window_bounds = array<i64: 128, 128>}, {pipeline_mode = #tpu.pipeline_mode<synchronous>, transform_indices = @transform_5, window_bounds = array<i64: 1, 64>}, {pipeline_mode = #tpu.pipeline_mode<synchronous>, transform_indices = @transform_6, window_bounds = array<i64: 64, 64>}, {pipeline_mode = #tpu.pipeline_mode<synchronous>, transform_indices = @transform_7, window_bounds = array<i64: 1, 64>}, {pipeline_mode = #tpu.pipeline_mode<synchronous>, transform_indices = @transform_8, window_bounds = array<i64: 64, 64>}, {pipeline_mode = #tpu.pipeline_mode<synchronous>, transform_indices = @transform_9, window_bounds = array<i64: 1, 64>}, {pipeline_mode = #tpu.pipeline_mode<synchronous>, transform_indices = @transform_10, window_bounds = array<i64: 1, 8>}, {pipeline_mode = #tpu.pipeline_mode<synchronous>, transform_indices = @transform_11, window_bounds = array<i64: 1, 16>}, {pipeline_mode = #tpu.pipeline_mode<synchronous>, transform_indices = @transform_12, window_bounds = array<i64: 1, 64>}, {pipeline_mode = #tpu.pipeline_mode<synchronous>, transform_indices = @transform_13, window_bounds = array<i64: 1, 1>}, {transform_indices = @transform_14, window_bounds = array<i64: 128, 1>}]} {
    %c0 = arith.constant 0 : index
    %c0_0 = arith.constant 0 : index
    %0 = vector.load %arg2[%c0, %c0_0] : memref<128x16xf32, #tpu.memory_space<vmem>>, vector<128x16xf32>
    %1 = vector.extract_strided_slice %0 {offsets = [0, 0], sizes = [128, 8], strides = [1, 1]} : vector<128x16xf32> to vector<128x8xf32>
    %2 = vector.extract_strided_slice %0 {offsets = [0, 8], sizes = [128, 8], strides = [1, 1]} : vector<128x16xf32> to vector<128x8xf32>
    %c0_1 = arith.constant 0 : index
    %c0_2 = arith.constant 0 : index
    %3 = vector.load %arg3[%c0_1, %c0_2] : memref<8x128xf32, #tpu.memory_space<vmem>>, vector<8x128xf32>
    %cst = arith.constant dense<0.000000e+00> : vector<128x128xf32>
    %4 = tpu.matmul %1, %3, %cst {dimension_numbers = #tpu.dot_dimension_numbers<[1], [0], [0], [1], [0, 0, 1, 1], [], []>} : vector<128x8xf32>, vector<8x128xf32>, vector<128x128xf32> -> vector<128x128xf32>
    %c0_3 = arith.constant 0 : index
    %c0_4 = arith.constant 0 : index
    %5 = vector.load %arg1[%c0_3, %c0_4] : memref<128x128xbf16, #tpu.memory_space<vmem>>, vector<128x128xbf16>
    %6 = arith.extf %5 : vector<128x128xbf16> to vector<128x128xf32>
    %7 = arith.mulf %6, %4 : vector<128x128xf32>
    %8 = arith.truncf %7 : vector<128x128xf32> to vector<128x128xbf16>
    %9 = arith.mulf %2, %1 : vector<128x8xf32>
    %c0_5 = arith.constant 0 : index
    %c0_6 = arith.constant 0 : index
    %10 = vector.load %arg5[%c0_5, %c0_6] : memref<128x128xbf16, #tpu.memory_space<vmem>>, vector<128x128xbf16>
    %cst_7 = arith.constant dense<0.000000e+00> : vector<128x128xf32>
    %11 = tpu.matmul %8, %10, %cst_7 {dimension_numbers = #tpu.dot_dimension_numbers<[1], [0], [0], [1], [0, 0, 1, 1], [], []>} : vector<128x128xbf16>, vector<128x128xbf16>, vector<128x128xf32> -> vector<128x128xf32>
    %12 = vector.extract_strided_slice %11 {offsets = [0, 0], sizes = [128, 16], strides = [1, 1]} : vector<128x128xf32> to vector<128x16xf32>
    %13 = vector.extract_strided_slice %11 {offsets = [0, 64], sizes = [128, 64], strides = [1, 1]} : vector<128x128xf32> to vector<128x64xf32>
    %c0_8 = arith.constant 0 : index
    %c0_9 = arith.constant 0 : index
    %14 = vector.load %arg6[%c0_8, %c0_9] : memref<1x64xf32, #tpu.memory_space<vmem>>, vector<1x64xf32>
    %15 = vector.broadcast %14 : vector<1x64xf32> to vector<128x64xf32>
    %16 = arith.addf %13, %15 : vector<128x64xf32>
    %cst_10 = arith.constant 0.000000e+00 : f32
    %17 = vector.broadcast %cst_10 : f32 to vector<128x64xf32>
    %18 = arith.maximumf %16, %17 : vector<128x64xf32>
    %19 = arith.mulf %7, %7 : vector<128x128xf32>
    %20 = arith.truncf %19 : vector<128x128xf32> to vector<128x128xbf16>
    %c0_11 = arith.constant 0 : index
    %c0_12 = arith.constant 0 : index
    %21 = vector.load %arg4[%c0_11, %c0_12] : memref<128x16xbf16, #tpu.memory_space<vmem>>, vector<128x16xbf16>
    %cst_13 = arith.constant dense<0.000000e+00> : vector<128x16xf32>
    %22 = tpu.matmul %20, %21, %cst_13 {dimension_numbers = #tpu.dot_dimension_numbers<[1], [0], [0], [1], [0, 0, 1, 1], [], []>} : vector<128x128xbf16>, vector<128x16xbf16>, vector<128x16xf32> -> vector<128x16xf32>
    %23 = arith.mulf %12, %12 : vector<128x16xf32>
    %24 = arith.subf %23, %22 : vector<128x16xf32>
    %cst_14 = arith.constant 5.000000e-01 : f32
    %25 = vector.broadcast %cst_14 : f32 to vector<128x16xf32>
    %26 = arith.mulf %25, %24 : vector<128x16xf32>
    %27 = arith.truncf %18 : vector<128x64xf32> to vector<128x64xbf16>
    %c0_15 = arith.constant 0 : index
    %c0_16 = arith.constant 0 : index
    %28 = vector.load %arg7[%c0_15, %c0_16] : memref<64x64xbf16, #tpu.memory_space<vmem>>, vector<64x64xbf16>
    %cst_17 = arith.constant dense<0.000000e+00> : vector<128x64xf32>
    %29 = tpu.matmul %27, %28, %cst_17 {dimension_numbers = #tpu.dot_dimension_numbers<[1], [0], [0], [1], [0, 0, 1, 1], [], []>} : vector<128x64xbf16>, vector<64x64xbf16>, vector<128x64xf32> -> vector<128x64xf32>
    %c0_18 = arith.constant 0 : index
    %c0_19 = arith.constant 0 : index
    %30 = vector.load %arg8[%c0_18, %c0_19] : memref<1x64xf32, #tpu.memory_space<vmem>>, vector<1x64xf32>
    %31 = vector.broadcast %30 : vector<1x64xf32> to vector<128x64xf32>
    %32 = arith.addf %29, %31 : vector<128x64xf32>
    %cst_20 = arith.constant 0.000000e+00 : f32
    %33 = vector.broadcast %cst_20 : f32 to vector<128x64xf32>
    %34 = arith.maximumf %32, %33 : vector<128x64xf32>
    %35 = arith.truncf %34 : vector<128x64xf32> to vector<128x64xbf16>
    %c0_21 = arith.constant 0 : index
    %c0_22 = arith.constant 0 : index
    %36 = vector.load %arg9[%c0_21, %c0_22] : memref<64x64xbf16, #tpu.memory_space<vmem>>, vector<64x64xbf16>
    %cst_23 = arith.constant dense<0.000000e+00> : vector<128x64xf32>
    %37 = tpu.matmul %35, %36, %cst_23 {dimension_numbers = #tpu.dot_dimension_numbers<[1], [0], [0], [1], [0, 0, 1, 1], [], []>} : vector<128x64xbf16>, vector<64x64xbf16>, vector<128x64xf32> -> vector<128x64xf32>
    %c0_24 = arith.constant 0 : index
    %c0_25 = arith.constant 0 : index
    %38 = vector.load %arg10[%c0_24, %c0_25] : memref<1x64xf32, #tpu.memory_space<vmem>>, vector<1x64xf32>
    %39 = vector.broadcast %38 : vector<1x64xf32> to vector<128x64xf32>
    %40 = arith.addf %37, %39 : vector<128x64xf32>
    %cst_26 = arith.constant 0.000000e+00 : f32
    %41 = vector.broadcast %cst_26 : f32 to vector<128x64xf32>
    %42 = arith.maximumf %40, %41 : vector<128x64xf32>
    %c0_27 = arith.constant 0 : index
    %c0_28 = arith.constant 0 : index
    %43 = vector.load %arg11[%c0_27, %c0_28] : memref<1x8xf32, #tpu.memory_space<vmem>>, vector<1x8xf32>
    %44 = vector.broadcast %43 : vector<1x8xf32> to vector<128x8xf32>
    %45 = arith.mulf %9, %44 : vector<128x8xf32>
    %cst_29 = arith.constant dense<0.000000e+00> : vector<128xf32>
    %46 = vector.multi_reduction <add>, %45, %cst_29 [1] : vector<128x8xf32> to vector<128xf32>
    %47 = vector.shape_cast %46 : vector<128xf32> to vector<128x1xf32>
    %c0_30 = arith.constant 0 : index
    %c0_31 = arith.constant 0 : index
    %48 = vector.load %arg12[%c0_30, %c0_31] : memref<1x16xf32, #tpu.memory_space<vmem>>, vector<1x16xf32>
    %49 = vector.broadcast %48 : vector<1x16xf32> to vector<128x16xf32>
    %50 = arith.mulf %26, %49 : vector<128x16xf32>
    %cst_32 = arith.constant dense<0.000000e+00> : vector<128xf32>
    %51 = vector.multi_reduction <add>, %50, %cst_32 [1] : vector<128x16xf32> to vector<128xf32>
    %52 = vector.shape_cast %51 : vector<128xf32> to vector<128x1xf32>
    %53 = arith.addf %47, %52 : vector<128x1xf32>
    %c0_33 = arith.constant 0 : index
    %c0_34 = arith.constant 0 : index
    %54 = vector.load %arg13[%c0_33, %c0_34] : memref<1x64xf32, #tpu.memory_space<vmem>>, vector<1x64xf32>
    %55 = vector.broadcast %54 : vector<1x64xf32> to vector<128x64xf32>
    %56 = arith.mulf %42, %55 : vector<128x64xf32>
    %cst_35 = arith.constant dense<0.000000e+00> : vector<128xf32>
    %57 = vector.multi_reduction <add>, %56, %cst_35 [1] : vector<128x64xf32> to vector<128xf32>
    %58 = vector.shape_cast %57 : vector<128xf32> to vector<128x1xf32>
    %59 = arith.addf %53, %58 : vector<128x1xf32>
    %c0_36 = arith.constant 0 : index
    %c0_37 = arith.constant 0 : index
    %60 = vector.load %arg14[%c0_36, %c0_37] : memref<1x1xf32, #tpu.memory_space<vmem>>, vector<1x1xf32>
    %61 = vector.broadcast %60 : vector<1x1xf32> to vector<128x1xf32>
    %62 = arith.addf %59, %61 : vector<128x1xf32>
    %c0_38 = arith.constant 0 : index
    %c0_39 = arith.constant 0 : index
    %63 = vector.load %arg15[%c0_38, %c0_39] : memref<128x1xf32, #tpu.memory_space<vmem>>, vector<128x1xf32>
    tpu.vector_store %arg15[%c0_38, %c0_39], %62 {strides = array<i32>} : memref<128x1xf32, #tpu.memory_space<vmem>>, vector<128x1xf32>,
    return
  }
  func.func @transform_0(%arg0: i32) -> (i32, i32) {
    %c0_i32 = arith.constant 0 : i32
    %c0_i32_0 = arith.constant 0 : i32
    return %arg0, %c0_i32 : i32, i32
  }
  func.func @transform_1(%arg0: i32) -> (i32, i32) {
    %c0_i32 = arith.constant 0 : i32
    %c0_i32_0 = arith.constant 0 : i32
    return %arg0, %c0_i32 : i32, i32
  }
  func.func @transform_2(%arg0: i32) -> (i32, i32) {
    %c0_i32 = arith.constant 0 : i32
    %c0_i32_0 = arith.constant 0 : i32
    %c0_i32_1 = arith.constant 0 : i32
    return %c0_i32, %c0_i32_0 : i32, i32
  }
  func.func @transform_3(%arg0: i32) -> (i32, i32) {
    %c0_i32 = arith.constant 0 : i32
    %c0_i32_0 = arith.constant 0 : i32
    %c0_i32_1 = arith.constant 0 : i32
    return %c0_i32, %c0_i32_0 : i32, i32
  }
  func.func @transform_4(%arg0: i32) -> (i32, i32) {
    %c0_i32 = arith.constant 0 : i32
    %c0_i32_0 = arith.constant 0 : i32
    %c0_i32_1 = arith.constant 0 : i32
    return %c0_i32, %c0_i32_0 : i32, i32
  }
  func.func @transform_5(%arg0: i32) -> (i32, i32) {
    %c0_i32 = arith.constant 0 : i32
    %c0_i32_0 = arith.constant 0 : i32
    %c0_i32_1 = arith.constant 0 : i32
    return %c0_i32, %c0_i32_0 : i32, i32
  }
  func.func @transform_6(%arg0: i32) -> (i32, i32) {
    %c0_i32 = arith.constant 0 : i32
    %c0_i32_0 = arith.constant 0 : i32
    %c0_i32_1 = arith.constant 0 : i32
    return %c0_i32, %c0_i32_0 : i32, i32
  }
  func.func @transform_7(%arg0: i32) -> (i32, i32) {
    %c0_i32 = arith.constant 0 : i32
    %c0_i32_0 = arith.constant 0 : i32
    %c0_i32_1 = arith.constant 0 : i32
    return %c0_i32, %c0_i32_0 : i32, i32
  }
  func.func @transform_8(%arg0: i32) -> (i32, i32) {
    %c0_i32 = arith.constant 0 : i32
    %c0_i32_0 = arith.constant 0 : i32
    %c0_i32_1 = arith.constant 0 : i32
    return %c0_i32, %c0_i32_0 : i32, i32
  }
  func.func @transform_9(%arg0: i32) -> (i32, i32) {
    %c0_i32 = arith.constant 0 : i32
    %c0_i32_0 = arith.constant 0 : i32
    %c0_i32_1 = arith.constant 0 : i32
    return %c0_i32, %c0_i32_0 : i32, i32
  }
  func.func @transform_10(%arg0: i32) -> (i32, i32) {
    %c0_i32 = arith.constant 0 : i32
    %c0_i32_0 = arith.constant 0 : i32
    %c0_i32_1 = arith.constant 0 : i32
    return %c0_i32, %c0_i32_0 : i32, i32
  }
  func.func @transform_11(%arg0: i32) -> (i32, i32) {
    %c0_i32 = arith.constant 0 : i32
    %c0_i32_0 = arith.constant 0 : i32
    %c0_i32_1 = arith.constant 0 : i32
    return %c0_i32, %c0_i32_0 : i32, i32
  }
  func.func @transform_12(%arg0: i32) -> (i32, i32) {
    %c0_i32 = arith.constant 0 : i32
    %c0_i32_0 = arith.constant 0 : i32
    %c0_i32_1 = arith.constant 0 : i32
    return %c0_i32, %c0_i32_0 : i32, i32
  }
  func.func @transform_13(%arg0: i32) -> (i32, i32) {
    %c0_i32 = arith.constant 0 : i32
    %c0_i32_0 = arith.constant 0 : i32
    %c0_i32_1 = arith.constant 0 : i32
    return %c0_i32, %c0_i32_0 : i32, i32
  }
  func.func @transform_14(%arg0: i32) -> (i32, i32) {
    %c0_i32 = arith.constant 0 : i32
    %c0_i32_0 = arith.constant 0 : i32
    return %arg0, %c0_i32 : i32, i32
  }
}

</mosaic_0001>

<llo_original>
// kernel: tpu_custom_call.1
$region0: #{tpu_custom_call.1}
  #allocation0 [shape = 'u32[]', space=smem, size = 0x4, offset = 0x4, fixed_abs, tag = 'smem constant byte address 0x4 - core index']
  #allocation1 [shape = 'u32[144,128]{1,0:T(1,128)}', space=vmem, size = 0x12000, scoped, tag = 'internal scratch']
  #allocation2 [shape = 'f32[1,1]{1,0:T(1,128)S(1)}', space=vmem, size = 0x200, scoped, tag = 'scoped memory for tpu_custom_call.1']
  %s0 = inlined_call_operand.vmem [shape: bf16[256,128], index: 0, kind: input, shape index: {}]
  %s1 = inlined_call_operand.vmem [shape: f32[256,16], index: 1, kind: input, shape index: {}]
  %s2 = inlined_call_operand.vmem [shape: f32[8,128], index: 2, kind: input, shape index: {}]
  %s3 = inlined_call_operand.vmem [shape: bf16[128,16], index: 3, kind: input, shape index: {}]
  %s4 = inlined_call_operand.vmem [shape: bf16[128,128], index: 4, kind: input, shape index: {}]
  %s5 = inlined_call_operand.vmem [shape: f32[1,64], index: 5, kind: input, shape index: {}]
  %s6 = inlined_call_operand.vmem [shape: bf16[64,64], index: 6, kind: input, shape index: {}]
  %s7 = inlined_call_operand.vmem [shape: f32[1,64], index: 7, kind: input, shape index: {}]
  %s8 = inlined_call_operand.vmem [shape: bf16[64,64], index: 8, kind: input, shape index: {}]
  %s9 = inlined_call_operand.vmem [shape: f32[1,64], index: 9, kind: input, shape index: {}]
  %s10 = inlined_call_operand.vmem [shape: f32[1,8], index: 10, kind: input, shape index: {}]
  %s11 = inlined_call_operand.vmem [shape: f32[1,16], index: 11, kind: input, shape index: {}]
  %s12 = inlined_call_operand.vmem [shape: f32[1,64], index: 12, kind: input, shape index: {}]
  %s13 = inlined_call_operand.<no memory space> [shape: f32[1,1], index: 13, kind: input, shape index: {}]
  %s14 = inlined_call_operand.vmem [shape: f32[256,1], index: 14, kind: output, shape index: {}]
  %s15 = sld [smem:[#allocation0]]
  $region89: #{tpu_custom_call.1} parent=0
    _
  %s17 = ssub.s32 1, %s15
  %s18 = scalar_select 0, %s17, %s15
  %v19 = vstv %s13
  %20 = vst [vmem:[#allocation2] sm:$0x1] %v19
  loop: start=0, step=1, limit=4
  $region2: #{tpu_custom_call.1} parent=0 // loop_pre_header
    _
  $region3: #{tpu_custom_call.1} parent=0 // loop_header
    %s22 = sphi 0, %s26
    %p23 = scmp.ge.s32.totalorder %s22, 4
    %s32 = sphi 0, %s34
    %s35 = sphi 0, %s32
    %s36 = sphi 0, %s35
    %s52 = sphi 0, %s36
    %s58 = sphi 0, %s60
    %s61 = sphi 0, %s58
    %s62 = sphi 0, %s61
    %s78 = sphi 0, %s62
    %s82 = sphi 0, %s82
    %s84 = sphi 0, %s82
    %s85 = sphi 0, %s84
    %s99 = sphi 0, %s85
    %s103 = sphi 0, %s103
    %s105 = sphi 0, %s103
    %s106 = sphi 0, %s105
    %s120 = sphi 0, %s106
    %s124 = sphi 0, %s124
    %s126 = sphi 0, %s124
    %s127 = sphi 0, %s126
    %s141 = sphi 0, %s127
    %s145 = sphi 0, %s145
    %s147 = sphi 0, %s145
    %s148 = sphi 0, %s147
    %s162 = sphi 0, %s148
    %s166 = sphi 0, %s166
    %s168 = sphi 0, %s166
    %s169 = sphi 0, %s168
    %s183 = sphi 0, %s169
    %s187 = sphi 0, %s187
    %s189 = sphi 0, %s187
    %s190 = sphi 0, %s189
    %s204 = sphi 0, %s190
    %s208 = sphi 0, %s208
    %s210 = sphi 0, %s208
    %s211 = sphi 0, %s210
    %s225 = sphi 0, %s211
    %s229 = sphi 0, %s229
    %s231 = sphi 0, %s229
    %s232 = sphi 0, %s231
    %s246 = sphi 0, %s232
    %s250 = sphi 0, %s250
    %s252 = sphi 0, %s250
    %s253 = sphi 0, %s252
    %s267 = sphi 0, %s253
    %s271 = sphi 0, %s271
    %s273 = sphi 0, %s271
    %s274 = sphi 0, %s273
    %s288 = sphi 0, %s274
    %s292 = sphi 0, %s292
    %s294 = sphi 0, %s292
    %s295 = sphi 0, %s294
    %s309 = sphi 0, %s295
    %s313 = sphi 0, %s313
    %s315 = sphi 0, %s313
    %s316 = sphi 0, %s315
    %s330 = sphi 0, %s316
    %s336 = sphi 0, %s338
    %s339 = sphi 0, %s336
    %s340 = sphi 0, %s339
    %s356 = sphi 0, %s340
  $region4: #{tpu_custom_call.1} parent=0 // loop_header_branch
    %25 = sbr.rel (%p23) target = $region8
  $region5: #{tpu_custom_call.1} parent=0 // loop_body
    %s27 = ssub.s32 %s22, 1
    %s28 = ssub.s32 %s22, 2
    %s29 = sadd.s32 %s22, 1
    %s30 = ssub.s32 %s22, %s29
    %p31 = scmp.eq.s32.totalorder %s30, 0
    %s33 = sadd.s32 %s32, 1
    %s34 = scalar_select %p31, %s32, %s33
    %p37 = pneg %p31
    %p38 = scmp.eq.s32.totalorder %s22, 1
    %p39 = por %p37, %p38
    %p40 = scmp.ne.s32.totalorder %s32, %s35
    %p41 = scmp.eq.s32.totalorder %s22, 0
    %p42 = por %p40, %p41
    %p43 = scmp.ne.s32.totalorder %s32, %s35
    %p44 = scmp.eq.s32.totalorder %s27, 1
    %p45 = por %p43, %p44
    %p46 = scmp.ne.s32.totalorder %s35, %s36
    %p47 = scmp.eq.s32.totalorder %s27, 0
    %p48 = por %p46, %p47
    %p49 = scmp.ne.s32.totalorder %s35, %s36
    %p50 = scmp.eq.s32.totalorder %s28, 1
    %p51 = por %p49, %p50
    %p53 = scmp.ne.s32.totalorder %s36, %s52
    %p54 = scmp.eq.s32.totalorder %s28, 0
    %p55 = por %p53, %p54
    %s56 = ssub.s32 %s22, %s29
    %p57 = scmp.eq.s32.totalorder %s56, 0
    %s59 = sadd.s32 %s58, 1
    %s60 = scalar_select %p57, %s58, %s59
    %p63 = pneg %p57
    %p64 = scmp.eq.s32.totalorder %s22, 1
    %p65 = por %p63, %p64
    %p66 = scmp.ne.s32.totalorder %s58, %s61
    %p67 = scmp.eq.s32.totalorder %s22, 0
    %p68 = por %p66, %p67
    %p69 = scmp.ne.s32.totalorder %s58, %s61
    %p70 = scmp.eq.s32.totalorder %s27, 1
    %p71 = por %p69, %p70
    %p72 = scmp.ne.s32.totalorder %s61, %s62
    %p73 = scmp.eq.s32.totalorder %s27, 0
    %p74 = por %p72, %p73
    %p75 = scmp.ne.s32.totalorder %s61, %s62
    %p76 = scmp.eq.s32.totalorder %s28, 1
    %p77 = por %p75, %p76
    %p79 = scmp.ne.s32.totalorder %s62, %s78
    %p80 = scmp.eq.s32.totalorder %s28, 0
    %p81 = por %p79, %p80
    %s83 = sadd.s32 %s82, 1
    %p86 = scmp.eq.s32.totalorder %s22, 1
    %p87 = scmp.ne.s32.totalorder %s82, %s84
    %p88 = scmp.eq.s32.totalorder %s22, 0
    %p89 = por %p87, %p88
    %p90 = scmp.ne.s32.totalorder %s82, %s84
    %p91 = scmp.eq.s32.totalorder %s27, 1
    %p92 = por %p90, %p91
    %p93 = scmp.ne.s32.totalorder %s84, %s85
    %p94 = scmp.eq.s32.totalorder %s27, 0
    %p95 = por %p93, %p94
    %p96 = scmp.ne.s32.totalorder %s84, %s85
    %p97 = scmp.eq.s32.totalorder %s28, 1
    %p98 = por %p96, %p97
    %p100 = scmp.ne.s32.totalorder %s85, %s99
    %p101 = scmp.eq.s32.totalorder %s28, 0
    %p102 = por %p100, %p101
    %s104 = sadd.s32 %s103, 1
    %p107 = scmp.eq.s32.totalorder %s22, 1
    %p108 = scmp.ne.s32.totalorder %s103, %s105
    %p109 = scmp.eq.s32.totalorder %s22, 0
    %p110 = por %p108, %p109
    %p111 = scmp.ne.s32.totalorder %s103, %s105
    %p112 = scmp.eq.s32.totalorder %s27, 1
    %p113 = por %p111, %p112
    %p114 = scmp.ne.s32.totalorder %s105, %s106
    %p115 = scmp.eq.s32.totalorder %s27, 0
    %p116 = por %p114, %p115
    %p117 = scmp.ne.s32.totalorder %s105, %s106
    %p118 = scmp.eq.s32.totalorder %s28, 1
    %p119 = por %p117, %p118
    %p121 = scmp.ne.s32.totalorder %s106, %s120
    %p122 = scmp.eq.s32.totalorder %s28, 0
    %p123 = por %p121, %p122
    %s125 = sadd.s32 %s124, 1
    %p128 = scmp.eq.s32.totalorder %s22, 1
    %p129 = scmp.ne.s32.totalorder %s124, %s126
    %p130 = scmp.eq.s32.totalorder %s22, 0
    %p131 = por %p129, %p130
    %p132 = scmp.ne.s32.totalorder %s124, %s126
    %p133 = scmp.eq.s32.totalorder %s27, 1
    %p134 = por %p132, %p133
    %p135 = scmp.ne.s32.totalorder %s126, %s127
    %p136 = scmp.eq.s32.totalorder %s27, 0
    %p137 = por %p135, %p136
    %p138 = scmp.ne.s32.totalorder %s126, %s127
    %p139 = scmp.eq.s32.totalorder %s28, 1
    %p140 = por %p138, %p139
    %p142 = scmp.ne.s32.totalorder %s127, %s141
    %p143 = scmp.eq.s32.totalorder %s28, 0
    %p144 = por %p142, %p143
    %s146 = sadd.s32 %s145, 1
    %p149 = scmp.eq.s32.totalorder %s22, 1
    %p150 = scmp.ne.s32.totalorder %s145, %s147
    %p151 = scmp.eq.s32.totalorder %s22, 0
    %p152 = por %p150, %p151
    %p153 = scmp.ne.s32.totalorder %s145, %s147
    %p154 = scmp.eq.s32.totalorder %s27, 1
    %p155 = por %p153, %p154
    %p156 = scmp.ne.s32.totalorder %s147, %s148
    %p157 = scmp.eq.s32.totalorder %s27, 0
    %p158 = por %p156, %p157
    %p159 = scmp.ne.s32.totalorder %s147, %s148
    %p160 = scmp.eq.s32.totalorder %s28, 1
    %p161 = por %p159, %p160
    %p163 = scmp.ne.s32.totalorder %s148, %s162
    %p164 = scmp.eq.s32.totalorder %s28, 0
    %p165 = por %p163, %p164
    %s167 = sadd.s32 %s166, 1
    %p170 = scmp.eq.s32.totalorder %s22, 1
    %p171 = scmp.ne.s32.totalorder %s166, %s168
    %p172 = scmp.eq.s32.totalorder %s22, 0
    %p173 = por %p171, %p172
    %p174 = scmp.ne.s32.totalorder %s166, %s168
    %p175 = scmp.eq.s32.totalorder %s27, 1
    %p176 = por %p174, %p175
    %p177 = scmp.ne.s32.totalorder %s168, %s169
    %p178 = scmp.eq.s32.totalorder %s27, 0
    %p179 = por %p177, %p178
    %p180 = scmp.ne.s32.totalorder %s168, %s169
    %p181 = scmp.eq.s32.totalorder %s28, 1
    %p182 = por %p180, %p181
    %p184 = scmp.ne.s32.totalorder %s169, %s183
    %p185 = scmp.eq.s32.totalorder %s28, 0
    %p186 = por %p184, %p185
    %s188 = sadd.s32 %s187, 1
    %p191 = scmp.eq.s32.totalorder %s22, 1
    %p192 = scmp.ne.s32.totalorder %s187, %s189
    %p193 = scmp.eq.s32.totalorder %s22, 0
    %p194 = por %p192, %p193
    %p195 = scmp.ne.s32.totalorder %s187, %s189
    %p196 = scmp.eq.s32.totalorder %s27, 1
    %p197 = por %p195, %p196
    %p198 = scmp.ne.s32.totalorder %s189, %s190
    %p199 = scmp.eq.s32.totalorder %s27, 0
    %p200 = por %p198, %p199
    %p201 = scmp.ne.s32.totalorder %s189, %s190
    %p202 = scmp.eq.s32.totalorder %s28, 1
    %p203 = por %p201, %p202
    %p205 = scmp.ne.s32.totalorder %s190, %s204
    %p206 = scmp.eq.s32.totalorder %s28, 0
    %p207 = por %p205, %p206
    %s209 = sadd.s32 %s208, 1
    %p212 = scmp.eq.s32.totalorder %s22, 1
    %p213 = scmp.ne.s32.totalorder %s208, %s210
    %p214 = scmp.eq.s32.totalorder %s22, 0
    %p215 = por %p213, %p214
    %p216 = scmp.ne.s32.totalorder %s208, %s210
    %p217 = scmp.eq.s32.totalorder %s27, 1
    %p218 = por %p216, %p217
    %p219 = scmp.ne.s32.totalorder %s210, %s211
    %p220 = scmp.eq.s32.totalorder %s27, 0
    %p221 = por %p219, %p220
    %p222 = scmp.ne.s32.totalorder %s210, %s211
    %p223 = scmp.eq.s32.totalorder %s28, 1
    %p224 = por %p222, %p223
    %p226 = scmp.ne.s32.totalorder %s211, %s225
    %p227 = scmp.eq.s32.totalorder %s28, 0
    %p228 = por %p226, %p227
    %s230 = sadd.s32 %s229, 1
    %p233 = scmp.eq.s32.totalorder %s22, 1
    %p234 = scmp.ne.s32.totalorder %s229, %s231
    %p235 = scmp.eq.s32.totalorder %s22, 0
    %p236 = por %p234, %p235
    %p237 = scmp.ne.s32.totalorder %s229, %s231
    %p238 = scmp.eq.s32.totalorder %s27, 1
    %p239 = por %p237, %p238
    %p240 = scmp.ne.s32.totalorder %s231, %s232
    %p241 = scmp.eq.s32.totalorder %s27, 0
    %p242 = por %p240, %p241
    %p243 = scmp.ne.s32.totalorder %s231, %s232
    %p244 = scmp.eq.s32.totalorder %s28, 1
    %p245 = por %p243, %p244
    %p247 = scmp.ne.s32.totalorder %s232, %s246
    %p248 = scmp.eq.s32.totalorder %s28, 0
    %p249 = por %p247, %p248
    %s251 = sadd.s32 %s250, 1
    %p254 = scmp.eq.s32.totalorder %s22, 1
    %p255 = scmp.ne.s32.totalorder %s250, %s252
    %p256 = scmp.eq.s32.totalorder %s22, 0
    %p257 = por %p255, %p256
    %p258 = scmp.ne.s32.totalorder %s250, %s252
    %p259 = scmp.eq.s32.totalorder %s27, 1
    %p260 = por %p258, %p259
    %p261 = scmp.ne.s32.totalorder %s252, %s253
    %p262 = scmp.eq.s32.totalorder %s27, 0
    %p263 = por %p261, %p262
    %p264 = scmp.ne.s32.totalorder %s252, %s253
    %p265 = scmp.eq.s32.totalorder %s28, 1
    %p266 = por %p264, %p265
    %p268 = scmp.ne.s32.totalorder %s253, %s267
    %p269 = scmp.eq.s32.totalorder %s28, 0
    %p270 = por %p268, %p269
    %s272 = sadd.s32 %s271, 1
    %p275 = scmp.eq.s32.totalorder %s22, 1
    %p276 = scmp.ne.s32.totalorder %s271, %s273
    %p277 = scmp.eq.s32.totalorder %s22, 0
    %p278 = por %p276, %p277
    %p279 = scmp.ne.s32.totalorder %s271, %s273
    %p280 = scmp.eq.s32.totalorder %s27, 1
    %p281 = por %p279, %p280
    %p282 = scmp.ne.s32.totalorder %s273, %s274
    %p283 = scmp.eq.s32.totalorder %s27, 0
    %p284 = por %p282, %p283
    %p285 = scmp.ne.s32.totalorder %s273, %s274
    %p286 = scmp.eq.s32.totalorder %s28, 1
    %p287 = por %p285, %p286
    %p289 = scmp.ne.s32.totalorder %s274, %s288
    %p290 = scmp.eq.s32.totalorder %s28, 0
    %p291 = por %p289, %p290
    %s293 = sadd.s32 %s292, 1
    %p296 = scmp.eq.s32.totalorder %s22, 1
    %p297 = scmp.ne.s32.totalorder %s292, %s294
    %p298 = scmp.eq.s32.totalorder %s22, 0
    %p299 = por %p297, %p298
    %p300 = scmp.ne.s32.totalorder %s292, %s294
    %p301 = scmp.eq.s32.totalorder %s27, 1
    %p302 = por %p300, %p301
    %p303 = scmp.ne.s32.totalorder %s294, %s295
    %p304 = scmp.eq.s32.totalorder %s27, 0
    %p305 = por %p303, %p304
    %p306 = scmp.ne.s32.totalorder %s294, %s295
    %p307 = scmp.eq.s32.totalorder %s28, 1
    %p308 = por %p306, %p307
    %p310 = scmp.ne.s32.totalorder %s295, %s309
    %p311 = scmp.eq.s32.totalorder %s28, 0
    %p312 = por %p310, %p311
    %s314 = sadd.s32 %s313, 1
    %p317 = scmp.eq.s32.totalorder %s22, 1
    %p318 = scmp.ne.s32.totalorder %s313, %s315
    %p319 = scmp.eq.s32.totalorder %s22, 0
    %p320 = por %p318, %p319
    %p321 = scmp.ne.s32.totalorder %s313, %s315
    %p322 = scmp.eq.s32.totalorder %s27, 1
    %p323 = por %p321, %p322
    %p324 = scmp.ne.s32.totalorder %s315, %s316
    %p325 = scmp.eq.s32.totalorder %s27, 0
    %p326 = por %p324, %p325
    %p327 = scmp.ne.s32.totalorder %s315, %s316
    %p328 = scmp.eq.s32.totalorder %s28, 1
    %p329 = por %p327, %p328
    %p331 = scmp.ne.s32.totalorder %s316, %s330
    %p332 = scmp.eq.s32.totalorder %s28, 0
    %p333 = por %p331, %p332
    %s334 = ssub.s32 %s22, %s29
    %p335 = scmp.eq.s32.totalorder %s334, 0
    %s337 = sadd.s32 %s336, 1
    %s338 = scalar_select %p335, %s336, %s337
    %p341 = pneg %p335
    %p342 = scmp.eq.s32.totalorder %s22, 1
    %p343 = por %p341, %p342
    %p344 = scmp.ne.s32.totalorder %s336, %s339
    %p345 = scmp.eq.s32.totalorder %s22, 0
    %p346 = por %p344, %p345
    %p347 = scmp.ne.s32.totalorder %s336, %s339
    %p348 = scmp.eq.s32.totalorder %s27, 1
    %p349 = por %p347, %p348
    %p350 = scmp.ne.s32.totalorder %s339, %s340
    %p351 = scmp.eq.s32.totalorder %s27, 0
    %p352 = por %p350, %p351
    %p353 = scmp.ne.s32.totalorder %s339, %s340
    %p354 = scmp.eq.s32.totalorder %s28, 1
    %p355 = por %p353, %p354
    %p357 = scmp.ne.s32.totalorder %s340, %s356
    %p358 = scmp.eq.s32.totalorder %s28, 0
    %p359 = por %p357, %p358
    %p360 = scmp.le.s32.totalorder 1, %s22
    %p361 = scmp.lt.s32.totalorder %s22, 3
    %p362 = pnand %p360, %p361
    %p363 = pneg %p362
    // Predicated region
    $region9: #{tpu_custom_call.1} parent=5 // pred_check
      _
    $region10: #{tpu_custom_call.1} parent=5 // pred_check_branch
      %365 = sbr.rel (%p362) target = $region12
    $region11: #{tpu_custom_call.1} parent=5 // pred_region
      %s366 = ssub.s32 %s22, 1
      // Predicated region
      $region13: #{tpu_custom_call.1} parent=11 // pred_check
        %p367 = pneg %p95
      $region14: #{tpu_custom_call.1} parent=11 // pred_check_branch
        %369 = sbr.rel (%p367) target = $region16
      $region15: #{tpu_custom_call.1} parent=11 // pred_region
        _
      $region16: #{tpu_custom_call.1} parent=11 // pred_fallthru
        _
      // Predicated region
      $region17: #{tpu_custom_call.1} parent=11 // pred_check
        %p370 = pneg %p116
      $region18: #{tpu_custom_call.1} parent=11 // pred_check_branch
        %372 = sbr.rel (%p370) target = $region20
      $region19: #{tpu_custom_call.1} parent=11 // pred_region
        _
      $region20: #{tpu_custom_call.1} parent=11 // pred_fallthru
        _
      // Predicated region
      $region21: #{tpu_custom_call.1} parent=11 // pred_check
        %p373 = pneg %p137
      $region22: #{tpu_custom_call.1} parent=11 // pred_check_branch
        %375 = sbr.rel (%p373) target = $region24
      $region23: #{tpu_custom_call.1} parent=11 // pred_region
        _
      $region24: #{tpu_custom_call.1} parent=11 // pred_fallthru
        _
      // Predicated region
      $region25: #{tpu_custom_call.1} parent=11 // pred_check
        %p376 = pneg %p158
      $region26: #{tpu_custom_call.1} parent=11 // pred_check_branch
        %378 = sbr.rel (%p376) target = $region28
      $region27: #{tpu_custom_call.1} parent=11 // pred_region
        _
      $region28: #{tpu_custom_call.1} parent=11 // pred_fallthru
        _
      // Predicated region
      $region29: #{tpu_custom_call.1} parent=11 // pred_check
        %p379 = pneg %p179
      $region30: #{tpu_custom_call.1} parent=11 // pred_check_branch
        %381 = sbr.rel (%p379) target = $region32
      $region31: #{tpu_custom_call.1} parent=11 // pred_region
        _
      $region32: #{tpu_custom_call.1} parent=11 // pred_fallthru
        _
      // Predicated region
      $region33: #{tpu_custom_call.1} parent=11 // pred_check
        %p382 = pneg %p200
      $region34: #{tpu_custom_call.1} parent=11 // pred_check_branch
        %384 = sbr.rel (%p382) target = $region36
      $region35: #{tpu_custom_call.1} parent=11 // pred_region
        _
      $region36: #{tpu_custom_call.1} parent=11 // pred_fallthru
        _
      // Predicated region
      $region37: #{tpu_custom_call.1} parent=11 // pred_check
        %p385 = pneg %p221
      $region38: #{tpu_custom_call.1} parent=11 // pred_check_branch
        %387 = sbr.rel (%p385) target = $region40
      $region39: #{tpu_custom_call.1} parent=11 // pred_region
        _
      $region40: #{tpu_custom_call.1} parent=11 // pred_fallthru
        _
      // Predicated region
      $region41: #{tpu_custom_call.1} parent=11 // pred_check
        %p388 = pneg %p242
      $region42: #{tpu_custom_call.1} parent=11 // pred_check_branch
        %390 = sbr.rel (%p388) target = $region44
      $region43: #{tpu_custom_call.1} parent=11 // pred_region
        _
      $region44: #{tpu_custom_call.1} parent=11 // pred_fallthru
        _
      // Predicated region
      $region45: #{tpu_custom_call.1} parent=11 // pred_check
        %p391 = pneg %p263
      $region46: #{tpu_custom_call.1} parent=11 // pred_check_branch
        %393 = sbr.rel (%p391) target = $region48
      $region47: #{tpu_custom_call.1} parent=11 // pred_region
        _
      $region48: #{tpu_custom_call.1} parent=11 // pred_fallthru
        _
      // Predicated region
      $region49: #{tpu_custom_call.1} parent=11 // pred_check
        %p394 = pneg %p284
      $region50: #{tpu_custom_call.1} parent=11 // pred_check_branch
        %396 = sbr.rel (%p394) target = $region52
      $region51: #{tpu_custom_call.1} parent=11 // pred_region
        _
      $region52: #{tpu_custom_call.1} parent=11 // pred_fallthru
        _
      // Predicated region
      $region53: #{tpu_custom_call.1} parent=11 // pred_check
        %p397 = pneg %p305
      $region54: #{tpu_custom_call.1} parent=11 // pred_check_branch
        %399 = sbr.rel (%p397) target = $region56
      $region55: #{tpu_custom_call.1} parent=11 // pred_region
        _
      $region56: #{tpu_custom_call.1} parent=11 // pred_fallthru
        _
      // Predicated region
      $region57: #{tpu_custom_call.1} parent=11 // pred_check
        %p400 = pneg %p326
      $region58: #{tpu_custom_call.1} parent=11 // pred_check_branch
        %402 = sbr.rel (%p400) target = $region60
      $region59: #{tpu_custom_call.1} parent=11 // pred_region
        _
      $region60: #{tpu_custom_call.1} parent=11 // pred_fallthru
        _
    $region12: #{tpu_custom_call.1} parent=5 // pred_fallthru
      _
    %p403 = scmp.lt.s32.totalorder %s22, 2
    // Predicated region
    $region61: #{tpu_custom_call.1} parent=5 // pred_check
      %p404 = pneg %p403
    $region62: #{tpu_custom_call.1} parent=5 // pred_check_branch
      %406 = sbr.rel (%p404) target = $region64
    $region63: #{tpu_custom_call.1} parent=5 // pred_region
      // Predicated region
      $region65: #{tpu_custom_call.1} parent=63 // pred_check
        %p407 = pneg %p42
      $region66: #{tpu_custom_call.1} parent=63 // pred_check_branch
        %409 = sbr.rel (%p407) target = $region68
      $region67: #{tpu_custom_call.1} parent=63 // pred_region
        %s410 = smul.u32 16, %s22
        %p411 = scmp.lt.s32.totalorder %s410, 31
        %s412 = scalar_select %p411, %s410, 31
        %s413 = smul.addr %s412, 4
        %s414 = scalar_lea.vmem %s0, %s413
        %s415 = smul.u32 16, %s22
      $region68: #{tpu_custom_call.1} parent=63 // pred_fallthru
        _
      // Predicated region
      $region69: #{tpu_custom_call.1} parent=63 // pred_check
        %p416 = pneg %p68
      $region70: #{tpu_custom_call.1} parent=63 // pred_check_branch
        %418 = sbr.rel (%p416) target = $region72
      $region71: #{tpu_custom_call.1} parent=63 // pred_region
        %s419 = smul.u32 16, %s22
        %p420 = scmp.lt.s32.totalorder %s419, 31
        %s421 = scalar_select %p420, %s419, 31
        %s422 = smul.addr %s421, 8
        %s423 = scalar_lea.vmem %s1, %s422
        %s424 = smul.u32 16, %s22
      $region72: #{tpu_custom_call.1} parent=63 // pred_fallthru
        _
    $region64: #{tpu_custom_call.1} parent=5 // pred_fallthru
      _
    %p425 = scmp.le.s32.totalorder 1, %s22
    %p426 = scmp.lt.s32.totalorder %s22, 3
    %p427 = pnand %p425, %p426
    %p428 = pneg %p427
    // Predicated region
    $region73: #{tpu_custom_call.1} parent=5 // pred_check
      _
    $region74: #{tpu_custom_call.1} parent=5 // pred_check_branch
      %430 = sbr.rel (%p427) target = $region76
    $region75: #{tpu_custom_call.1} parent=5 // pred_region
      %s431 = ssub.s32 %s22, 1
      %s432 = smul.u32 16, %s27
      %p433 = scmp.lt.s32.totalorder %s432, 31
      %s434 = scalar_select %p433, %s432, 31
      %s435 = smul.addr %s434, 4
      %s436 = scalar_lea.vmem %s0, %s435
      %p437 = pneg %p48
      %p438 = pneg %p45
      %s439 = smul.u32 16, %s27
      %p440 = scmp.lt.s32.totalorder %s439, 31
      %s441 = scalar_select %p440, %s439, 31
      %s442 = smul.addr %s441, 8
      %s443 = scalar_lea.vmem %s1, %s442
      %p444 = pneg %p74
      %p445 = pneg %p71
      %p446 = pneg %p95
      %p447 = pneg %p92
      %p448 = pneg %p116
      %p449 = pneg %p113
      %p450 = pneg %p137
      %p451 = pneg %p134
      %p452 = pneg %p158
      %p453 = pneg %p155
      %p454 = pneg %p179
      %p455 = pneg %p176
      %p456 = pneg %p200
      %p457 = pneg %p197
      %p458 = pneg %p221
      %p459 = pneg %p218
      %p460 = pneg %p242
      %p461 = pneg %p239
      %p462 = pneg %p263
      %p463 = pneg %p260
      %p464 = pneg %p284
      %p465 = pneg %p281
      %p466 = pneg %p305
      %p467 = pneg %p302
      %p468 = pneg %p326
      %p469 = pneg %p323
      %p470 = pneg %p352
      %p471 = pneg %p349
      %s472 = smul.u32 16, %s27
      %p473 = scmp.lt.s32.totalorder %s472, 31
      %s474 = scalar_select %p473, %s472, 31
      %s475 = smul.addr %s474, 8
      %s476 = scalar_lea.vmem %s14, %s475
      %s477 = smul.u32 16, %s27
      %p478 = scmp.lt.s32.totalorder %s477, 31
      %s479 = scalar_select %p478, %s477, 31
      %s480 = smul.addr %s479, 4
      %s481 = scalar_lea.vmem %s0, %s480
      %s482 = smul.u32 16, %s27
      %s483 = smul.u32 16, %s27
      %p484 = scmp.lt.s32.totalorder %s483, 31
      %s485 = scalar_select %p484, %s483, 31
      %s486 = smul.addr %s485, 8
      %s487 = scalar_lea.vmem %s1, %s486
      %s488 = smul.u32 16, %s27
      %s489 = smul.u32 16, %s27
      %p490 = scmp.lt.s32.totalorder %s489, 31
      %s491 = scalar_select %p490, %s489, 31
      %s492 = smul.addr %s491, 8
      %s493 = scalar_lea.vmem %s14, %s492
      %s494 = smul.u32 16, %s27
      %v496 = vld [vmem:[%s487] sm:$0xff]
      %v497 = vld [vmem:[%s487 + $0x8] sm:$0xff]
      %v498 = vld [vmem:[%s487 + $0x10] sm:$0xff]
      %v499 = vld [vmem:[%s487 + $0x18] sm:$0xff]
      %v500 = vld [vmem:[%s487 + $0x20] sm:$0xff]
      %v501 = vld [vmem:[%s487 + $0x28] sm:$0xff]
      %v502 = vld [vmem:[%s487 + $0x30] sm:$0xff]
      %v503 = vld [vmem:[%s487 + $0x38] sm:$0xff]
      %v504 = vld [vmem:[%s487 + $0x40] sm:$0xff]
      %v505 = vld [vmem:[%s487 + $0x48] sm:$0xff]
      %v506 = vld [vmem:[%s487 + $0x50] sm:$0xff]
      %v507 = vld [vmem:[%s487 + $0x58] sm:$0xff]
      %v508 = vld [vmem:[%s487 + $0x60] sm:$0xff]
      %v509 = vld [vmem:[%s487 + $0x68] sm:$0xff]
      %v510 = vld [vmem:[%s487 + $0x70] sm:$0xff]
      %v511 = vld [vmem:[%s487 + $0x78] sm:$0xff]
      %v512 = vld [vmem:[%s2] sm:$0xff]
      %vm513 = vcmask 64512
      %v515 = vsel %vm513, %v496, 0
      %v518 = vsel %vm513, %v497, 0
      %v521 = vsel %vm513, %v498, 0
      %v524 = vsel %vm513, %v499, 0
      %v527 = vsel %vm513, %v500, 0
      %v530 = vsel %vm513, %v501, 0
      %v533 = vsel %vm513, %v502, 0
      %v536 = vsel %vm513, %v503, 0
      %v539 = vsel %vm513, %v504, 0
      %v542 = vsel %vm513, %v505, 0
      %v545 = vsel %vm513, %v506, 0
      %v548 = vsel %vm513, %v507, 0
      %v551 = vsel %vm513, %v508, 0
      %v554 = vsel %vm513, %v509, 0
      %v557 = vsel %vm513, %v510, 0
      %v560 = vsel %vm513, %v511, 0
      %562 = vmatprep.subr.mxu0 0.0
      %563 = vmatpush1.msra.mxu0 %v512
      %564 = vmatprep.subr.mxu0 0.0
      %565 = vmatpush1.msra.mxu0 0.0
      %566 = vmatprep.subr.mxu0 0.0
      %567 = vmatpush1.msra.mxu0 0.0
      %568 = vmatprep.subr.mxu0 0.0
      %569 = vmatpush1.msra.mxu0 0.0
      %570 = vmatprep.subr.mxu0 0.0
      %571 = vmatpush1.msra.mxu0 0.0
      %572 = vmatprep.subr.mxu0 0.0
      %573 = vmatpush1.msra.mxu0 0.0
      %574 = vmatprep.subr.mxu0 0.0
      %575 = vmatpush1.msra.mxu0 0.0
      %576 = vmatprep.subr.mxu0 0.0
      %577 = vmatpush1.msra.mxu0 0.0
      %578 = vmatprep.subr.mxu0 0.0
      %579 = vmatpush1.msra.mxu0 0.0
      %580 = vmatprep.subr.mxu0 0.0
      %581 = vmatpush1.msra.mxu0 0.0
      %582 = vmatprep.subr.mxu0 0.0
      %583 = vmatpush1.msra.mxu0 0.0
      %584 = vmatprep.subr.mxu0 0.0
      %585 = vmatpush1.msra.mxu0 0.0
      %586 = vmatprep.subr.mxu0 0.0
      %587 = vmatpush1.msra.mxu0 0.0
      %588 = vmatprep.subr.mxu0 0.0
      %589 = vmatpush1.msra.mxu0 0.0
      %590 = vmatprep.subr.mxu0 0.0
      %591 = vmatpush1.msra.mxu0 0.0
      %592 = vmatprep.subr.mxu0 0.0
      %593 = vmatpush1.msra.mxu0 0.0
      %594 = vmatprep.subr.mxu0 0.0
      %595 = vmatpush1.msra.mxu0 0.0
      %596 = vmatprep.subr.mxu0 0.0
      %597 = vmatpush1.msra.mxu0 0.0
      %598 = vmatprep.subr.mxu0 0.0
      %599 = vmatpush1.msra.mxu0 0.0
      %600 = vmatprep.subr.mxu0 0.0
      %601 = vmatpush1.msra.mxu0 0.0
      %602 = vmatprep.subr.mxu0 0.0
      %603 = vmatpush1.msra.mxu0 0.0
      %604 = vmatprep.subr.mxu0 0.0
      %605 = vmatpush1.msra.mxu0 0.0
      %606 = vmatprep.subr.mxu0 0.0
      %607 = vmatpush1.msra.mxu0 0.0
      %608 = vmatprep.subr.mxu0 0.0
      %609 = vmatpush1.msra.mxu0 0.0
      %610 = vmatprep.subr.mxu0 0.0
      %611 = vmatpush1.msra.mxu0 0.0
      %612 = vmatprep.subr.mxu0 0.0
      %613 = vmatpush1.msra.mxu0 0.0
      %614 = vmatprep.subr.mxu0 0.0
      %615 = vmatpush1.msra.mxu0 0.0
      %616 = vmatprep.subr.mxu0 0.0
      %617 = vmatpush1.msra.mxu0 0.0
      %618 = vmatprep.subr.mxu0 0.0
      %619 = vmatpush1.msra.mxu0 0.0
      %620 = vmatprep.subr.mxu0 0.0
      %621 = vmatpush1.msra.mxu0 0.0
      %622 = vmatprep.subr.mxu0 0.0
      %623 = vmatpush1.msra.mxu0 0.0
      %624 = vmatprep.subr.mxu0 0.0
      %625 = vmatpush1.msra.mxu0 0.0
      %626 = vmatprep.mubr.f32.mxu0 0.0
      %627 = vmatmul.mubr.f32.gmra.mrb[0].mxu0 %v515
      %v628 = vpop.f32.mrb[0].mxu0
      %v629 = vadd.f32 0.0, %v628
      %v630 = vpop.f32.mrb[0].mxu0
      %631 = vmatprep.mubr.f32.mxu0 0.0
      %632 = vmatmul.mubr.f32.gmra.mrb[0].mxu0 %v518
      %v633 = vpop.f32.mrb[0].mxu0
      %v634 = vadd.f32 0.0, %v633
      %v635 = vpop.f32.mrb[0].mxu0
      %636 = vmatprep.mubr.f32.mxu0 0.0
      %637 = vmatmul.mubr.f32.gmra.mrb[0].mxu0 %v521
      %v638 = vpop.f32.mrb[0].mxu0
      %v639 = vadd.f32 0.0, %v638
      %v640 = vpop.f32.mrb[0].mxu0
      %641 = vmatprep.mubr.f32.mxu0 0.0
      %642 = vmatmul.mubr.f32.gmra.mrb[0].mxu0 %v524
      %v643 = vpop.f32.mrb[0].mxu0
      %v644 = vadd.f32 0.0, %v643
      %v645 = vpop.f32.mrb[0].mxu0
      %646 = vmatprep.mubr.f32.mxu0 0.0
      %647 = vmatmul.mubr.f32.gmra.mrb[0].mxu0 %v527
      %v648 = vpop.f32.mrb[0].mxu0
      %v649 = vadd.f32 0.0, %v648
      %v650 = vpop.f32.mrb[0].mxu0
      %651 = vmatprep.mubr.f32.mxu0 0.0
      %652 = vmatmul.mubr.f32.gmra.mrb[0].mxu0 %v530
      %v653 = vpop.f32.mrb[0].mxu0
      %v654 = vadd.f32 0.0, %v653
      %v655 = vpop.f32.mrb[0].mxu0
      %656 = vmatprep.mubr.f32.mxu0 0.0
      %657 = vmatmul.mubr.f32.gmra.mrb[0].mxu0 %v533
      %v658 = vpop.f32.mrb[0].mxu0
      %v659 = vadd.f32 0.0, %v658
      %v660 = vpop.f32.mrb[0].mxu0
      %661 = vmatprep.mubr.f32.mxu0 0.0
      %662 = vmatmul.mubr.f32.gmra.mrb[0].mxu0 %v536
      %v663 = vpop.f32.mrb[0].mxu0
      %v664 = vadd.f32 0.0, %v663
      %v665 = vpop.f32.mrb[0].mxu0
      %666 = vmatprep.mubr.f32.mxu0 0.0
      %667 = vmatmul.mubr.f32.gmra.mrb[0].mxu0 %v539
      %v668 = vpop.f32.mrb[0].mxu0
      %v669 = vadd.f32 0.0, %v668
      %v670 = vpop.f32.mrb[0].mxu0
      %671 = vmatprep.mubr.f32.mxu0 0.0
      %672 = vmatmul.mubr.f32.gmra.mrb[0].mxu0 %v542
      %v673 = vpop.f32.mrb[0].mxu0
      %v674 = vadd.f32 0.0, %v673
      %v675 = vpop.f32.mrb[0].mxu0
      %676 = vmatprep.mubr.f32.mxu0 0.0
      %677 = vmatmul.mubr.f32.gmra.mrb[0].mxu0 %v545
      %v678 = vpop.f32.mrb[0].mxu0
      %v679 = vadd.f32 0.0, %v678
      %v680 = vpop.f32.mrb[0].mxu0
      %681 = vmatprep.mubr.f32.mxu0 0.0
      %682 = vmatmul.mubr.f32.gmra.mrb[0].mxu0 %v548
      %v683 = vpop.f32.mrb[0].mxu0
      %v684 = vadd.f32 0.0, %v683
      %v685 = vpop.f32.mrb[0].mxu0
      %686 = vmatprep.mubr.f32.mxu0 0.0
      %687 = vmatmul.mubr.f32.gmra.mrb[0].mxu0 %v551
      %v688 = vpop.f32.mrb[0].mxu0
      %v689 = vadd.f32 0.0, %v688
      %v690 = vpop.f32.mrb[0].mxu0
      %691 = vmatprep.mubr.f32.mxu0 0.0
      %692 = vmatmul.mubr.f32.gmra.mrb[0].mxu0 %v554
      %v693 = vpop.f32.mrb[0].mxu0
      %v694 = vadd.f32 0.0, %v693
      %v695 = vpop.f32.mrb[0].mxu0
      %696 = vmatprep.mubr.f32.mxu0 0.0
      %697 = vmatmul.mubr.f32.gmra.mrb[0].mxu0 %v557
      %v698 = vpop.f32.mrb[0].mxu0
      %v699 = vadd.f32 0.0, %v698
      %v700 = vpop.f32.mrb[0].mxu0
      %701 = vmatprep.mubr.f32.mxu0 0.0
      %702 = vmatmul.mubr.f32.gmra.mrb[0].mxu0 %v560
      %v703 = vpop.f32.mrb[0].mxu0
      %v704 = vadd.f32 0.0, %v703
      %v705 = vpop.f32.mrb[0].mxu0
      %706 = vdwg.mxu0
      %v707 = vld [vmem:[%s481] sm:$0xf]
      %v708 = vld [vmem:[%s481 + $0x4] sm:$0xf]
      %v709 = vld [vmem:[%s481 + $0x8] sm:$0xf]
      %v710 = vld [vmem:[%s481 + $0xc] sm:$0xf]
      %v711 = vld [vmem:[%s481 + $0x10] sm:$0xf]
      %v712 = vld [vmem:[%s481 + $0x14] sm:$0xf]
      %v713 = vld [vmem:[%s481 + $0x18] sm:$0xf]
      %v714 = vld [vmem:[%s481 + $0x1c] sm:$0xf]
      %v715 = vld [vmem:[%s481 + $0x20] sm:$0xf]
      %v716 = vld [vmem:[%s481 + $0x24] sm:$0xf]
      %v717 = vld [vmem:[%s481 + $0x28] sm:$0xf]
      %v718 = vld [vmem:[%s481 + $0x2c] sm:$0xf]
      %v719 = vld [vmem:[%s481 + $0x30] sm:$0xf]
      %v720 = vld [vmem:[%s481 + $0x34] sm:$0xf]
      %v721 = vld [vmem:[%s481 + $0x38] sm:$0xf]
      %v722 = vld [vmem:[%s481 + $0x3c] sm:$0xf]
      %v723 = vunpack.c.l.bf16 %v707
      %v724 = vunpack.c.l.bf16 %v708
      %v725 = vunpack.c.l.bf16 %v709
      %v726 = vunpack.c.l.bf16 %v710
      %v727 = vunpack.c.l.bf16 %v711
      %v728 = vunpack.c.l.bf16 %v712
      %v729 = vunpack.c.l.bf16 %v713
      %v730 = vunpack.c.l.bf16 %v714
      %v731 = vunpack.c.l.bf16 %v715
      %v732 = vunpack.c.l.bf16 %v716
      %v733 = vunpack.c.l.bf16 %v717
      %v734 = vunpack.c.l.bf16 %v718
      %v735 = vunpack.c.l.bf16 %v719
      %v736 = vunpack.c.l.bf16 %v720
      %v737 = vunpack.c.l.bf16 %v721
      %v738 = vunpack.c.l.bf16 %v722
      %v739 = vmul.f32 %v723, %v629
      %v740 = vmul.f32 %v724, %v634
      %v741 = vmul.f32 %v725, %v639
      %v742 = vmul.f32 %v726, %v644
      %v743 = vmul.f32 %v727, %v649
      %v744 = vmul.f32 %v728, %v654
      %v745 = vmul.f32 %v729, %v659
      %v746 = vmul.f32 %v730, %v664
      %v747 = vmul.f32 %v731, %v669
      %v748 = vmul.f32 %v732, %v674
      %v749 = vmul.f32 %v733, %v679
      %v750 = vmul.f32 %v734, %v684
      %v751 = vmul.f32 %v735, %v689
      %v752 = vmul.f32 %v736, %v694
      %v753 = vmul.f32 %v737, %v699
      %v754 = vmul.f32 %v738, %v704
      %v755 = vpack.c.bf16 %v740, %v739
      %v756 = vpack.c.bf16 %v742, %v741
      %v757 = vpack.c.bf16 %v744, %v743
      %v758 = vpack.c.bf16 %v746, %v745
      %v759 = vpack.c.bf16 %v748, %v747
      %v760 = vpack.c.bf16 %v750, %v749
      %v761 = vpack.c.bf16 %v752, %v751
      %v762 = vpack.c.bf16 %v754, %v753
      %763 = vrot.lane.b32.xlu0 %v496, 8
      %v764 = vpop.permute.xlu0 %763
      %765 = vrot.lane.b32.xlu0 %v497, 8
      %v766 = vpop.permute.xlu0 %765
      %767 = vrot.lane.b32.xlu0 %v498, 8
      %v768 = vpop.permute.xlu0 %767
      %769 = vrot.lane.b32.xlu0 %v499, 8
      %v770 = vpop.permute.xlu0 %769
      %771 = vrot.lane.b32.xlu0 %v500, 8
      %v772 = vpop.permute.xlu0 %771
      %773 = vrot.lane.b32.xlu0 %v501, 8
      %v774 = vpop.permute.xlu0 %773
      %775 = vrot.lane.b32.xlu0 %v502, 8
      %v776 = vpop.permute.xlu0 %775
      %777 = vrot.lane.b32.xlu0 %v503, 8
      %v778 = vpop.permute.xlu0 %777
      %779 = vrot.lane.b32.xlu0 %v504, 8
      %v780 = vpop.permute.xlu0 %779
      %781 = vrot.lane.b32.xlu0 %v505, 8
      %v782 = vpop.permute.xlu0 %781
      %783 = vrot.lane.b32.xlu0 %v506, 8
      %v784 = vpop.permute.xlu0 %783
      %785 = vrot.lane.b32.xlu0 %v507, 8
      %v786 = vpop.permute.xlu0 %785
      %787 = vrot.lane.b32.xlu0 %v508, 8
      %v788 = vpop.permute.xlu0 %787
      %789 = vrot.lane.b32.xlu0 %v509, 8
      %v790 = vpop.permute.xlu0 %789
      %791 = vrot.lane.b32.xlu0 %v510, 8
      %v792 = vpop.permute.xlu0 %791
      %793 = vrot.lane.b32.xlu0 %v511, 8
      %v794 = vpop.permute.xlu0 %793
      %v811 = vmul.f32 %v496, %v764
      %v812 = vmul.f32 %v497, %v766
      %v813 = vmul.f32 %v498, %v768
      %v814 = vmul.f32 %v499, %v770
      %v815 = vmul.f32 %v500, %v772
      %v816 = vmul.f32 %v501, %v774
      %v817 = vmul.f32 %v502, %v776
      %v818 = vmul.f32 %v503, %v778
      %v819 = vmul.f32 %v504, %v780
      %v820 = vmul.f32 %v505, %v782
      %v821 = vmul.f32 %v506, %v784
      %v822 = vmul.f32 %v507, %v786
      %v823 = vmul.f32 %v508, %v788
      %v824 = vmul.f32 %v509, %v790
      %v825 = vmul.f32 %v510, %v792
      %v826 = vmul.f32 %v511, %v794
      %v827 = vld [vmem:[%s4] sm:$0xf]
      %v828 = vld [vmem:[%s4 + $0x4] sm:$0xf]
      %v829 = vld [vmem:[%s4 + $0x8] sm:$0xf]
      %v830 = vld [vmem:[%s4 + $0xc] sm:$0xf]
      %v831 = vld [vmem:[%s4 + $0x10] sm:$0xf]
      %v832 = vld [vmem:[%s4 + $0x14] sm:$0xf]
      %v833 = vld [vmem:[%s4 + $0x18] sm:$0xf]
      %v834 = vld [vmem:[%s4 + $0x1c] sm:$0xf]
      %v835 = vld [vmem:[%s4 + $0x20] sm:$0xf]
      %v836 = vld [vmem:[%s4 + $0x24] sm:$0xf]
      %v837 = vld [vmem:[%s4 + $0x28] sm:$0xf]
      %v838 = vld [vmem:[%s4 + $0x2c] sm:$0xf]
      %v839 = vld [vmem:[%s4 + $0x30] sm:$0xf]
      %v840 = vld [vmem:[%s4 + $0x34] sm:$0xf]
      %v841 = vld [vmem:[%s4 + $0x38] sm:$0xf]
      %v842 = vld [vmem:[%s4 + $0x3c] sm:$0xf]
      %v859 = vunpack.c.l.b16 %v827
      %v860 = vunpack.c.l.b16 %v828
      %v861 = vunpack.c.l.b16 %v829
      %v862 = vunpack.c.l.b16 %v830
      %v863 = vunpack.c.l.b16 %v831
      %v864 = vunpack.c.l.b16 %v832
      %v865 = vunpack.c.l.b16 %v833
      %v866 = vunpack.c.l.b16 %v834
      %v867 = vunpack.c.l.b16 %v835
      %v868 = vunpack.c.l.b16 %v836
      %v869 = vunpack.c.l.b16 %v837
      %v870 = vunpack.c.l.b16 %v838
      %v871 = vunpack.c.l.b16 %v839
      %v872 = vunpack.c.l.b16 %v840
      %v873 = vunpack.c.l.b16 %v841
      %v874 = vunpack.c.l.b16 %v842
      %v875 = vpack.c.b16 %v860, %v859
      %v876 = vpack.c.b16 %v862, %v861
      %v877 = vpack.c.b16 %v864, %v863
      %v878 = vpack.c.b16 %v866, %v865
      %v879 = vpack.c.b16 %v868, %v867
      %v880 = vpack.c.b16 %v870, %v869
      %v881 = vpack.c.b16 %v872, %v871
      %v882 = vpack.c.b16 %v874, %v873
      %891 = vmatprep.subr.bf16.mxu0 0
      %892 = vmatpush1.bf16.msra.mxu0 %v875
      %893 = vmatprep.subr.bf16.mxu0 0
      %894 = vmatpush1.bf16.msra.mxu0 %v876
      %895 = vmatprep.subr.bf16.mxu0 0
      %896 = vmatpush1.bf16.msra.mxu0 %v877
      %897 = vmatprep.subr.bf16.mxu0 0
      %898 = vmatpush1.bf16.msra.mxu0 %v878
      %899 = vmatprep.subr.bf16.mxu0 0
      %900 = vmatpush1.bf16.msra.mxu0 %v879
      %901 = vmatprep.subr.bf16.mxu0 0
      %902 = vmatpush1.bf16.msra.mxu0 %v880
      %903 = vmatprep.subr.bf16.mxu0 0
      %904 = vmatpush1.bf16.msra.mxu0 %v881
      %905 = vmatprep.subr.bf16.mxu0 0
      %906 = vmatpush1.bf16.msra.mxu0 %v882
      %907 = vmatprep.subr.bf16.mxu0 0
      %908 = vmatpush1.bf16.msra.mxu0 0
      %909 = vmatprep.subr.bf16.mxu0 0
      %910 = vmatpush1.bf16.msra.mxu0 0
      %911 = vmatprep.subr.bf16.mxu0 0
      %912 = vmatpush1.bf16.msra.mxu0 0
      %913 = vmatprep.subr.bf16.mxu0 0
      %914 = vmatpush1.bf16.msra.mxu0 0
      %915 = vmatprep.subr.bf16.mxu0 0
      %916 = vmatpush1.bf16.msra.mxu0 0
      %917 = vmatprep.subr.bf16.mxu0 0
      %918 = vmatpush1.bf16.msra.mxu0 0
      %919 = vmatprep.subr.bf16.mxu0 0
      %920 = vmatpush1.bf16.msra.mxu0 0
      %921 = vmatprep.subr.bf16.mxu0 0
      %922 = vmatpush1.bf16.msra.mxu0 0
      %923 = vmatprep.mubr.bf16.mxu0 0
      %924 = vmatmul.mubr.bf16.gmra.mrb[0].mxu0 %v755
      %v925 = vpop.f32.mrb[0].mxu0
      %v926 = vadd.f32 0.0, %v925
      %v927 = vpop.f32.mrb[0].mxu0
      %v928 = vpop.f32.mrb[0].mxu0
      %v929 = vadd.f32 0.0, %v928
      %v930 = vpop.f32.mrb[0].mxu0
      %931 = vmatprep.mubr.bf16.mxu0 0
      %932 = vmatmul.mubr.bf16.gmra.mrb[0].mxu0 %v756
      %v933 = vpop.f32.mrb[0].mxu0
      %v934 = vadd.f32 0.0, %v933
      %v935 = vpop.f32.mrb[0].mxu0
      %v936 = vpop.f32.mrb[0].mxu0
      %v937 = vadd.f32 0.0, %v936
      %v938 = vpop.f32.mrb[0].mxu0
      %939 = vmatprep.mubr.bf16.mxu0 0
      %940 = vmatmul.mubr.bf16.gmra.mrb[0].mxu0 %v757
      %v941 = vpop.f32.mrb[0].mxu0
      %v942 = vadd.f32 0.0, %v941
      %v943 = vpop.f32.mrb[0].mxu0
      %v944 = vpop.f32.mrb[0].mxu0
      %v945 = vadd.f32 0.0, %v944
      %v946 = vpop.f32.mrb[0].mxu0
      %947 = vmatprep.mubr.bf16.mxu0 0
      %948 = vmatmul.mubr.bf16.gmra.mrb[0].mxu0 %v758
      %v949 = vpop.f32.mrb[0].mxu0
      %v950 = vadd.f32 0.0, %v949
      %v951 = vpop.f32.mrb[0].mxu0
      %v952 = vpop.f32.mrb[0].mxu0
      %v953 = vadd.f32 0.0, %v952
      %v954 = vpop.f32.mrb[0].mxu0
      %955 = vmatprep.mubr.bf16.mxu0 0
      %956 = vmatmul.mubr.bf16.gmra.mrb[0].mxu0 %v759
      %v957 = vpop.f32.mrb[0].mxu0
      %v958 = vadd.f32 0.0, %v957
      %v959 = vpop.f32.mrb[0].mxu0
      %v960 = vpop.f32.mrb[0].mxu0
      %v961 = vadd.f32 0.0, %v960
      %v962 = vpop.f32.mrb[0].mxu0
      %963 = vmatprep.mubr.bf16.mxu0 0
      %964 = vmatmul.mubr.bf16.gmra.mrb[0].mxu0 %v760
      %v965 = vpop.f32.mrb[0].mxu0
      %v966 = vadd.f32 0.0, %v965
      %v967 = vpop.f32.mrb[0].mxu0
      %v968 = vpop.f32.mrb[0].mxu0
      %v969 = vadd.f32 0.0, %v968
      %v970 = vpop.f32.mrb[0].mxu0
      %971 = vmatprep.mubr.bf16.mxu0 0
      %972 = vmatmul.mubr.bf16.gmra.mrb[0].mxu0 %v761
      %v973 = vpop.f32.mrb[0].mxu0
      %v974 = vadd.f32 0.0, %v973
      %v975 = vpop.f32.mrb[0].mxu0
      %v976 = vpop.f32.mrb[0].mxu0
      %v977 = vadd.f32 0.0, %v976
      %v978 = vpop.f32.mrb[0].mxu0
      %979 = vmatprep.mubr.bf16.mxu0 0
      %980 = vmatmul.mubr.bf16.gmra.mrb[0].mxu0 %v762
      %v981 = vpop.f32.mrb[0].mxu0
      %v982 = vadd.f32 0.0, %v981
      %v983 = vpop.f32.mrb[0].mxu0
      %v984 = vpop.f32.mrb[0].mxu0
      %v985 = vadd.f32 0.0, %v984
      %v986 = vpop.f32.mrb[0].mxu0
      %987 = vdwg.mxu0
      %v988 = vld [vmem:[%s5] sm:$0x1]
      %v990 = vlaneseq
      %v991 = vshrl.u32 %v990, 7
      %v992 = vsub.s32 0, %v991
      %v993 = vrot.slane %v988, %v992
      %994 = vrot.lane.b32.xlu0 %v993, 64
      %v995 = vpop.permute.xlu0 %994
      %v997 = vadd.f32 %v926, %v995
      %v998 = vadd.f32 %v929, %v995
      %v999 = vadd.f32 %v934, %v995
      %v1000 = vadd.f32 %v937, %v995
      %v1001 = vadd.f32 %v942, %v995
      %v1002 = vadd.f32 %v945, %v995
      %v1003 = vadd.f32 %v950, %v995
      %v1004 = vadd.f32 %v953, %v995
      %v1005 = vadd.f32 %v958, %v995
      %v1006 = vadd.f32 %v961, %v995
      %v1007 = vadd.f32 %v966, %v995
      %v1008 = vadd.f32 %v969, %v995
      %v1009 = vadd.f32 %v974, %v995
      %v1010 = vadd.f32 %v977, %v995
      %v1011 = vadd.f32 %v982, %v995
      %v1012 = vadd.f32 %v985, %v995
      %v1013 = vmax.f32 %v997, 0.0
      %v1014 = vmax.f32 %v998, 0.0
      %v1015 = vmax.f32 %v999, 0.0
      %v1016 = vmax.f32 %v1000, 0.0
      %v1017 = vmax.f32 %v1001, 0.0
      %v1018 = vmax.f32 %v1002, 0.0
      %v1019 = vmax.f32 %v1003, 0.0
      %v1020 = vmax.f32 %v1004, 0.0
      %v1021 = vmax.f32 %v1005, 0.0
      %v1022 = vmax.f32 %v1006, 0.0
      %v1023 = vmax.f32 %v1007, 0.0
      %v1024 = vmax.f32 %v1008, 0.0
      %v1025 = vmax.f32 %v1009, 0.0
      %v1026 = vmax.f32 %v1010, 0.0
      %v1027 = vmax.f32 %v1011, 0.0
      %v1028 = vmax.f32 %v1012, 0.0
      %v1029 = vmul.f32 %v739, %v739
      %v1030 = vmul.f32 %v740, %v740
      %v1031 = vmul.f32 %v741, %v741
      %v1032 = vmul.f32 %v742, %v742
      %v1033 = vmul.f32 %v743, %v743
      %v1034 = vmul.f32 %v744, %v744
      %v1035 = vmul.f32 %v745, %v745
      %v1036 = vmul.f32 %v746, %v746
      %v1037 = vmul.f32 %v747, %v747
      %v1038 = vmul.f32 %v748, %v748
      %v1039 = vmul.f32 %v749, %v749
      %v1040 = vmul.f32 %v750, %v750
      %v1041 = vmul.f32 %v751, %v751
      %v1042 = vmul.f32 %v752, %v752
      %v1043 = vmul.f32 %v753, %v753
      %v1044 = vmul.f32 %v754, %v754
      %v1045 = vpack.c.bf16 %v1030, %v1029
      %v1046 = vpack.c.bf16 %v1032, %v1031
      %v1047 = vpack.c.bf16 %v1034, %v1033
      %v1048 = vpack.c.bf16 %v1036, %v1035
      %v1049 = vpack.c.bf16 %v1038, %v1037
      %v1050 = vpack.c.bf16 %v1040, %v1039
      %v1051 = vpack.c.bf16 %v1042, %v1041
      %v1052 = vpack.c.bf16 %v1044, %v1043
      %v1053 = vld [vmem:[%s3] sm:$0xf]
      %v1054 = vld [vmem:[%s3 + $0x4] sm:$0xf]
      %v1055 = vld [vmem:[%s3 + $0x8] sm:$0xf]
      %v1056 = vld [vmem:[%s3 + $0xc] sm:$0xf]
      %v1057 = vld [vmem:[%s3 + $0x10] sm:$0xf]
      %v1058 = vld [vmem:[%s3 + $0x14] sm:$0xf]
      %v1059 = vld [vmem:[%s3 + $0x18] sm:$0xf]
      %v1060 = vld [vmem:[%s3 + $0x1c] sm:$0xf]
      %v1061 = vld [vmem:[%s3 + $0x20] sm:$0xf]
      %v1062 = vld [vmem:[%s3 + $0x24] sm:$0xf]
      %v1063 = vld [vmem:[%s3 + $0x28] sm:$0xf]
      %v1064 = vld [vmem:[%s3 + $0x2c] sm:$0xf]
      %v1065 = vld [vmem:[%s3 + $0x30] sm:$0xf]
      %v1066 = vld [vmem:[%s3 + $0x34] sm:$0xf]
      %v1067 = vld [vmem:[%s3 + $0x38] sm:$0xf]
      %v1068 = vld [vmem:[%s3 + $0x3c] sm:$0xf]
      %v1085 = vunpack.c.l.b16 %v1053
      %v1086 = vunpack.c.l.b16 %v1054
      %v1087 = vunpack.c.l.b16 %v1055
      %v1088 = vunpack.c.l.b16 %v1056
      %v1089 = vunpack.c.l.b16 %v1057
      %v1090 = vunpack.c.l.b16 %v1058
      %v1091 = vunpack.c.l.b16 %v1059
      %v1092 = vunpack.c.l.b16 %v1060
      %v1093 = vunpack.c.l.b16 %v1061
      %v1094 = vunpack.c.l.b16 %v1062
      %v1095 = vunpack.c.l.b16 %v1063
      %v1096 = vunpack.c.l.b16 %v1064
      %v1097 = vunpack.c.l.b16 %v1065
      %v1098 = vunpack.c.l.b16 %v1066
      %v1099 = vunpack.c.l.b16 %v1067
      %v1100 = vunpack.c.l.b16 %v1068
      %v1101 = vpack.c.b16 %v1086, %v1085
      %v1102 = vpack.c.b16 %v1088, %v1087
      %v1103 = vpack.c.b16 %v1090, %v1089
      %v1104 = vpack.c.b16 %v1092, %v1091
      %v1105 = vpack.c.b16 %v1094, %v1093
      %v1106 = vpack.c.b16 %v1096, %v1095
      %v1107 = vpack.c.b16 %v1098, %v1097
      %v1108 = vpack.c.b16 %v1100, %v1099
      %1117 = vmatprep.subr.bf16.mxu0 0
      %1118 = vmatpush1.bf16.msra.mxu0 %v1101
      %1119 = vmatprep.subr.bf16.mxu0 0
      %1120 = vmatpush1.bf16.msra.mxu0 %v1102
      %1121 = vmatprep.subr.bf16.mxu0 0
      %1122 = vmatpush1.bf16.msra.mxu0 %v1103
      %1123 = vmatprep.subr.bf16.mxu0 0
      %1124 = vmatpush1.bf16.msra.mxu0 %v1104
      %1125 = vmatprep.subr.bf16.mxu0 0
      %1126 = vmatpush1.bf16.msra.mxu0 %v1105
      %1127 = vmatprep.subr.bf16.mxu0 0
      %1128 = vmatpush1.bf16.msra.mxu0 %v1106
      %1129 = vmatprep.subr.bf16.mxu0 0
      %1130 = vmatpush1.bf16.msra.mxu0 %v1107
      %1131 = vmatprep.subr.bf16.mxu0 0
      %1132 = vmatpush1.bf16.msra.mxu0 %v1108
      %1133 = vmatprep.subr.bf16.mxu0 0
      %1134 = vmatpush1.bf16.msra.mxu0 0
      %1135 = vmatprep.subr.bf16.mxu0 0
      %1136 = vmatpush1.bf16.msra.mxu0 0
      %1137 = vmatprep.subr.bf16.mxu0 0
      %1138 = vmatpush1.bf16.msra.mxu0 0
      %1139 = vmatprep.subr.bf16.mxu0 0
      %1140 = vmatpush1.bf16.msra.mxu0 0
      %1141 = vmatprep.subr.bf16.mxu0 0
      %1142 = vmatpush1.bf16.msra.mxu0 0
      %1143 = vmatprep.subr.bf16.mxu0 0
      %1144 = vmatpush1.bf16.msra.mxu0 0
      %1145 = vmatprep.subr.bf16.mxu0 0
      %1146 = vmatpush1.bf16.msra.mxu0 0
      %1147 = vmatprep.subr.bf16.mxu0 0
      %1148 = vmatpush1.bf16.msra.mxu0 0
      %1149 = vmatprep.mubr.bf16.mxu0 0
      %1150 = vmatmul.mubr.bf16.gmra.mrb[0].mxu0 %v1045
      %v1151 = vpop.f32.mrb[0].mxu0
      %v1152 = vadd.f32 0.0, %v1151
      %v1153 = vpop.f32.mrb[0].mxu0
      %v1154 = vpop.f32.mrb[0].mxu0
      %v1155 = vadd.f32 0.0, %v1154
      %v1156 = vpop.f32.mrb[0].mxu0
      %1157 = vmatprep.mubr.bf16.mxu0 0
      %1158 = vmatmul.mubr.bf16.gmra.mrb[0].mxu0 %v1046
      %v1159 = vpop.f32.mrb[0].mxu0
      %v1160 = vadd.f32 0.0, %v1159
      %v1161 = vpop.f32.mrb[0].mxu0
      %v1162 = vpop.f32.mrb[0].mxu0
      %v1163 = vadd.f32 0.0, %v1162
      %v1164 = vpop.f32.mrb[0].mxu0
      %1165 = vmatprep.mubr.bf16.mxu0 0
      %1166 = vmatmul.mubr.bf16.gmra.mrb[0].mxu0 %v1047
      %v1167 = vpop.f32.mrb[0].mxu0
      %v1168 = vadd.f32 0.0, %v1167
      %v1169 = vpop.f32.mrb[0].mxu0
      %v1170 = vpop.f32.mrb[0].mxu0
      %v1171 = vadd.f32 0.0, %v1170
      %v1172 = vpop.f32.mrb[0].mxu0
      %1173 = vmatprep.mubr.bf16.mxu0 0
      %1174 = vmatmul.mubr.bf16.gmra.mrb[0].mxu0 %v1048
      %v1175 = vpop.f32.mrb[0].mxu0
      %v1176 = vadd.f32 0.0, %v1175
      %v1177 = vpop.f32.mrb[0].mxu0
      %v1178 = vpop.f32.mrb[0].mxu0
      %v1179 = vadd.f32 0.0, %v1178
      %v1180 = vpop.f32.mrb[0].mxu0
      %1181 = vmatprep.mubr.bf16.mxu0 0
      %1182 = vmatmul.mubr.bf16.gmra.mrb[0].mxu0 %v1049
      %v1183 = vpop.f32.mrb[0].mxu0
      %v1184 = vadd.f32 0.0, %v1183
      %v1185 = vpop.f32.mrb[0].mxu0
      %v1186 = vpop.f32.mrb[0].mxu0
      %v1187 = vadd.f32 0.0, %v1186
      %v1188 = vpop.f32.mrb[0].mxu0
      %1189 = vmatprep.mubr.bf16.mxu0 0
      %1190 = vmatmul.mubr.bf16.gmra.mrb[0].mxu0 %v1050
      %v1191 = vpop.f32.mrb[0].mxu0
      %v1192 = vadd.f32 0.0, %v1191
      %v1193 = vpop.f32.mrb[0].mxu0
      %v1194 = vpop.f32.mrb[0].mxu0
      %v1195 = vadd.f32 0.0, %v1194
      %v1196 = vpop.f32.mrb[0].mxu0
      %1197 = vmatprep.mubr.bf16.mxu0 0
      %1198 = vmatmul.mubr.bf16.gmra.mrb[0].mxu0 %v1051
      %v1199 = vpop.f32.mrb[0].mxu0
      %v1200 = vadd.f32 0.0, %v1199
      %v1201 = vpop.f32.mrb[0].mxu0
      %v1202 = vpop.f32.mrb[0].mxu0
      %v1203 = vadd.f32 0.0, %v1202
      %v1204 = vpop.f32.mrb[0].mxu0
      %1205 = vmatprep.mubr.bf16.mxu0 0
      %1206 = vmatmul.mubr.bf16.gmra.mrb[0].mxu0 %v1052
      %v1207 = vpop.f32.mrb[0].mxu0
      %v1208 = vadd.f32 0.0, %v1207
      %v1209 = vpop.f32.mrb[0].mxu0
      %v1210 = vpop.f32.mrb[0].mxu0
      %v1211 = vadd.f32 0.0, %v1210
      %v1212 = vpop.f32.mrb[0].mxu0
      %1213 = vdwg.mxu0
      %v1214 = vmul.f32 %v926, %v926
      %v1215 = vmul.f32 %v929, %v929
      %v1216 = vmul.f32 %v934, %v934
      %v1217 = vmul.f32 %v937, %v937
      %v1218 = vmul.f32 %v942, %v942
      %v1219 = vmul.f32 %v945, %v945
      %v1220 = vmul.f32 %v950, %v950
      %v1221 = vmul.f32 %v953, %v953
      %v1222 = vmul.f32 %v958, %v958
      %v1223 = vmul.f32 %v961, %v961
      %v1224 = vmul.f32 %v966, %v966
      %v1225 = vmul.f32 %v969, %v969
      %v1226 = vmul.f32 %v974, %v974
      %v1227 = vmul.f32 %v977, %v977
      %v1228 = vmul.f32 %v982, %v982
      %v1229 = vmul.f32 %v985, %v985
      %v1230 = vsub.f32 %v1214, %v1152
      %v1231 = vsub.f32 %v1215, %v1155
      %v1232 = vsub.f32 %v1216, %v1160
      %v1233 = vsub.f32 %v1217, %v1163
      %v1234 = vsub.f32 %v1218, %v1168
      %v1235 = vsub.f32 %v1219, %v1171
      %v1236 = vsub.f32 %v1220, %v1176
      %v1237 = vsub.f32 %v1221, %v1179
      %v1238 = vsub.f32 %v1222, %v1184
      %v1239 = vsub.f32 %v1223, %v1187
      %v1240 = vsub.f32 %v1224, %v1192
      %v1241 = vsub.f32 %v1225, %v1195
      %v1242 = vsub.f32 %v1226, %v1200
      %v1243 = vsub.f32 %v1227, %v1203
      %v1244 = vsub.f32 %v1228, %v1208
      %v1245 = vsub.f32 %v1229, %v1211
      %v1246 = vmul.f32 %v1230, 0.5
      %v1247 = vmul.f32 %v1231, 0.5
      %v1248 = vmul.f32 %v1232, 0.5
      %v1249 = vmul.f32 %v1233, 0.5
      %v1250 = vmul.f32 %v1234, 0.5
      %v1251 = vmul.f32 %v1235, 0.5
      %v1252 = vmul.f32 %v1236, 0.5
      %v1253 = vmul.f32 %v1237, 0.5
      %v1254 = vmul.f32 %v1238, 0.5
      %v1255 = vmul.f32 %v1239, 0.5
      %v1256 = vmul.f32 %v1240, 0.5
      %v1257 = vmul.f32 %v1241, 0.5
      %v1258 = vmul.f32 %v1242, 0.5
      %v1259 = vmul.f32 %v1243, 0.5
      %v1260 = vmul.f32 %v1244, 0.5
      %v1261 = vmul.f32 %v1245, 0.5
      %v1262 = vpack.c.bf16 %v1014, %v1013
      %v1263 = vpack.c.bf16 %v1016, %v1015
      %v1264 = vpack.c.bf16 %v1018, %v1017
      %v1265 = vpack.c.bf16 %v1020, %v1019
      %v1266 = vpack.c.bf16 %v1022, %v1021
      %v1267 = vpack.c.bf16 %v1024, %v1023
      %v1268 = vpack.c.bf16 %v1026, %v1025
      %v1269 = vpack.c.bf16 %v1028, %v1027
      %v1270 = vld [vmem:[%s6] sm:$0xf]
      %v1271 = vld [vmem:[%s6 + $0x4] sm:$0xf]
      %v1272 = vld [vmem:[%s6 + $0x8] sm:$0xf]
      %v1273 = vld [vmem:[%s6 + $0xc] sm:$0xf]
      %v1274 = vld [vmem:[%s6 + $0x10] sm:$0xf]
      %v1275 = vld [vmem:[%s6 + $0x14] sm:$0xf]
      %v1276 = vld [vmem:[%s6 + $0x18] sm:$0xf]
      %v1277 = vld [vmem:[%s6 + $0x1c] sm:$0xf]
      %v1278 = vld [vmem:[%s7] sm:$0x1]
      %v1280 = vlaneseq
      %v1281 = vshrl.u32 %v1280, 7
      %v1282 = vsub.s32 0, %v1281
      %v1283 = vrot.slane %v1278, %v1282
      %1293 = vrot.lane.b32.xlu0 %v1262, 64
      %v1294 = vpop.permute.xlu0 %1293
      %1295 = vrot.lane.b32.xlu0 %v1263, 64
      %v1296 = vpop.permute.xlu0 %1295
      %1297 = vrot.lane.b32.xlu0 %v1264, 64
      %v1298 = vpop.permute.xlu0 %1297
      %1299 = vrot.lane.b32.xlu0 %v1265, 64
      %v1300 = vpop.permute.xlu0 %1299
      %1301 = vrot.lane.b32.xlu0 %v1266, 64
      %v1302 = vpop.permute.xlu0 %1301
      %1303 = vrot.lane.b32.xlu0 %v1267, 64
      %v1304 = vpop.permute.xlu0 %1303
      %1305 = vrot.lane.b32.xlu0 %v1268, 64
      %v1306 = vpop.permute.xlu0 %1305
      %1307 = vrot.lane.b32.xlu0 %v1269, 64
      %v1308 = vpop.permute.xlu0 %1307
      %v1317 = vunpack.c.l.b16 %v1270
      %v1318 = vunpack.c.l.b16 %v1271
      %v1319 = vunpack.c.l.b16 %v1272
      %v1320 = vunpack.c.l.b16 %v1273
      %v1321 = vunpack.c.l.b16 %v1274
      %v1322 = vunpack.c.l.b16 %v1275
      %v1323 = vunpack.c.l.b16 %v1276
      %v1324 = vunpack.c.l.b16 %v1277
      %v1325 = vpack.c.b16 %v1318, %v1317
      %v1326 = vpack.c.b16 %v1320, %v1319
      %v1327 = vpack.c.b16 %v1322, %v1321
      %v1328 = vpack.c.b16 %v1324, %v1323
      %vm1333 = vcmask 523264
      %v1335 = vsel %vm1333, %v1294, 0
      %v1338 = vsel %vm1333, %v1296, 0
      %v1341 = vsel %vm1333, %v1298, 0
      %v1344 = vsel %vm1333, %v1300, 0
      %v1347 = vsel %vm1333, %v1302, 0
      %v1350 = vsel %vm1333, %v1304, 0
      %v1353 = vsel %vm1333, %v1306, 0
      %v1356 = vsel %vm1333, %v1308, 0
      %1358 = vmatprep.subr.bf16.mxu0 0
      %1359 = vmatpush1.bf16.msra.mxu0 %v1325
      %1360 = vmatprep.subr.bf16.mxu0 0
      %1361 = vmatpush1.bf16.msra.mxu0 %v1326
      %1362 = vmatprep.subr.bf16.mxu0 0
      %1363 = vmatpush1.bf16.msra.mxu0 %v1327
      %1364 = vmatprep.subr.bf16.mxu0 0
      %1365 = vmatpush1.bf16.msra.mxu0 %v1328
      %1366 = vmatprep.subr.bf16.mxu0 0
      %1367 = vmatpush1.bf16.msra.mxu0 0
      %1368 = vmatprep.subr.bf16.mxu0 0
      %1369 = vmatpush1.bf16.msra.mxu0 0
      %1370 = vmatprep.subr.bf16.mxu0 0
      %1371 = vmatpush1.bf16.msra.mxu0 0
      %1372 = vmatprep.subr.bf16.mxu0 0
      %1373 = vmatpush1.bf16.msra.mxu0 0
      %1374 = vmatprep.subr.bf16.mxu0 0
      %1375 = vmatpush1.bf16.msra.mxu0 0
      %1376 = vmatprep.subr.bf16.mxu0 0
      %1377 = vmatpush1.bf16.msra.mxu0 0
      %1378 = vmatprep.subr.bf16.mxu0 0
      %1379 = vmatpush1.bf16.msra.mxu0 0
      %1380 = vmatprep.subr.bf16.mxu0 0
      %1381 = vmatpush1.bf16.msra.mxu0 0
      %1382 = vmatprep.subr.bf16.mxu0 0
      %1383 = vmatpush1.bf16.msra.mxu0 0
      %1384 = vmatprep.subr.bf16.mxu0 0
      %1385 = vmatpush1.bf16.msra.mxu0 0
      %1386 = vmatprep.subr.bf16.mxu0 0
      %1387 = vmatpush1.bf16.msra.mxu0 0
      %1388 = vmatprep.subr.bf16.mxu0 0
      %1389 = vmatpush1.bf16.msra.mxu0 0
      %1390 = vmatprep.mubr.bf16.mxu0 0
      %1391 = vmatmul.mubr.bf16.gmra.mrb[0].mxu0 %v1335
      %v1392 = vpop.f32.mrb[0].mxu0
      %v1393 = vadd.f32 %v1283, %v1392
      %v1394 = vpop.f32.mrb[0].mxu0
      %v1395 = vpop.f32.mrb[0].mxu0
      %v1396 = vadd.f32 %v1283, %v1395
      %v1397 = vpop.f32.mrb[0].mxu0
      %1398 = vmatprep.mubr.bf16.mxu0 0
      %1399 = vmatmul.mubr.bf16.gmra.mrb[0].mxu0 %v1338
      %v1400 = vpop.f32.mrb[0].mxu0
      %v1401 = vadd.f32 %v1283, %v1400
      %v1402 = vpop.f32.mrb[0].mxu0
      %v1403 = vpop.f32.mrb[0].mxu0
      %v1404 = vadd.f32 %v1283, %v1403
      %v1405 = vpop.f32.mrb[0].mxu0
      %1406 = vmatprep.mubr.bf16.mxu0 0
      %1407 = vmatmul.mubr.bf16.gmra.mrb[0].mxu0 %v1341
      %v1408 = vpop.f32.mrb[0].mxu0
      %v1409 = vadd.f32 %v1283, %v1408
      %v1410 = vpop.f32.mrb[0].mxu0
      %v1411 = vpop.f32.mrb[0].mxu0
      %v1412 = vadd.f32 %v1283, %v1411
      %v1413 = vpop.f32.mrb[0].mxu0
      %1414 = vmatprep.mubr.bf16.mxu0 0
      %1415 = vmatmul.mubr.bf16.gmra.mrb[0].mxu0 %v1344
      %v1416 = vpop.f32.mrb[0].mxu0
      %v1417 = vadd.f32 %v1283, %v1416
      %v1418 = vpop.f32.mrb[0].mxu0
      %v1419 = vpop.f32.mrb[0].mxu0
      %v1420 = vadd.f32 %v1283, %v1419
      %v1421 = vpop.f32.mrb[0].mxu0
      %1422 = vmatprep.mubr.bf16.mxu0 0
      %1423 = vmatmul.mubr.bf16.gmra.mrb[0].mxu0 %v1347
      %v1424 = vpop.f32.mrb[0].mxu0
      %v1425 = vadd.f32 %v1283, %v1424
      %v1426 = vpop.f32.mrb[0].mxu0
      %v1427 = vpop.f32.mrb[0].mxu0
      %v1428 = vadd.f32 %v1283, %v1427
      %v1429 = vpop.f32.mrb[0].mxu0
      %1430 = vmatprep.mubr.bf16.mxu0 0
      %1431 = vmatmul.mubr.bf16.gmra.mrb[0].mxu0 %v1350
      %v1432 = vpop.f32.mrb[0].mxu0
      %v1433 = vadd.f32 %v1283, %v1432
      %v1434 = vpop.f32.mrb[0].mxu0
      %v1435 = vpop.f32.mrb[0].mxu0
      %v1436 = vadd.f32 %v1283, %v1435
      %v1437 = vpop.f32.mrb[0].mxu0
      %1438 = vmatprep.mubr.bf16.mxu0 0
      %1439 = vmatmul.mubr.bf16.gmra.mrb[0].mxu0 %v1353
      %v1440 = vpop.f32.mrb[0].mxu0
      %v1441 = vadd.f32 %v1283, %v1440
      %v1442 = vpop.f32.mrb[0].mxu0
      %v1443 = vpop.f32.mrb[0].mxu0
      %v1444 = vadd.f32 %v1283, %v1443
      %v1445 = vpop.f32.mrb[0].mxu0
      %1446 = vmatprep.mubr.bf16.mxu0 0
      %1447 = vmatmul.mubr.bf16.gmra.mrb[0].mxu0 %v1356
      %v1448 = vpop.f32.mrb[0].mxu0
      %v1449 = vadd.f32 %v1283, %v1448
      %v1450 = vpop.f32.mrb[0].mxu0
      %v1451 = vpop.f32.mrb[0].mxu0
      %v1452 = vadd.f32 %v1283, %v1451
      %v1453 = vpop.f32.mrb[0].mxu0
      %1454 = vdwg.mxu0
      %v1455 = vmax.f32 %v1393, 0.0
      %v1456 = vmax.f32 %v1396, 0.0
      %v1457 = vmax.f32 %v1401, 0.0
      %v1458 = vmax.f32 %v1404, 0.0
      %v1459 = vmax.f32 %v1409, 0.0
      %v1460 = vmax.f32 %v1412, 0.0
      %v1461 = vmax.f32 %v1417, 0.0
      %v1462 = vmax.f32 %v1420, 0.0
      %v1463 = vmax.f32 %v1425, 0.0
      %v1464 = vmax.f32 %v1428, 0.0
      %v1465 = vmax.f32 %v1433, 0.0
      %v1466 = vmax.f32 %v1436, 0.0
      %v1467 = vmax.f32 %v1441, 0.0
      %v1468 = vmax.f32 %v1444, 0.0
      %v1469 = vmax.f32 %v1449, 0.0
      %v1470 = vmax.f32 %v1452, 0.0
      %v1471 = vpack.c.bf16 %v1456, %v1455
      %v1472 = vpack.c.bf16 %v1458, %v1457
      %v1473 = vpack.c.bf16 %v1460, %v1459
      %v1474 = vpack.c.bf16 %v1462, %v1461
      %v1475 = vpack.c.bf16 %v1464, %v1463
      %v1476 = vpack.c.bf16 %v1466, %v1465
      %v1477 = vpack.c.bf16 %v1468, %v1467
      %v1478 = vpack.c.bf16 %v1470, %v1469
      %v1479 = vld [vmem:[%s8] sm:$0xf]
      %v1480 = vld [vmem:[%s8 + $0x4] sm:$0xf]
      %v1481 = vld [vmem:[%s8 + $0x8] sm:$0xf]
      %v1482 = vld [vmem:[%s8 + $0xc] sm:$0xf]
      %v1483 = vld [vmem:[%s8 + $0x10] sm:$0xf]
      %v1484 = vld [vmem:[%s8 + $0x14] sm:$0xf]
      %v1485 = vld [vmem:[%s8 + $0x18] sm:$0xf]
      %v1486 = vld [vmem:[%s8 + $0x1c] sm:$0xf]
      %v1487 = vld [vmem:[%s9] sm:$0x1]
      %v1489 = vlaneseq
      %v1490 = vshrl.u32 %v1489, 7
      %v1491 = vsub.s32 0, %v1490
      %v1492 = vrot.slane %v1487, %v1491
      %v1502 = vunpack.c.l.b16 %v1479
      %v1503 = vunpack.c.l.b16 %v1480
      %v1504 = vunpack.c.l.b16 %v1481
      %v1505 = vunpack.c.l.b16 %v1482
      %v1506 = vunpack.c.l.b16 %v1483
      %v1507 = vunpack.c.l.b16 %v1484
      %v1508 = vunpack.c.l.b16 %v1485
      %v1509 = vunpack.c.l.b16 %v1486
      %v1510 = vpack.c.b16 %v1503, %v1502
      %v1511 = vpack.c.b16 %v1505, %v1504
      %v1512 = vpack.c.b16 %v1507, %v1506
      %v1513 = vpack.c.b16 %v1509, %v1508
      %v1519 = vsel %vm1333, %v1471, 0
      %v1522 = vsel %vm1333, %v1472, 0
      %v1525 = vsel %vm1333, %v1473, 0
      %v1528 = vsel %vm1333, %v1474, 0
      %v1531 = vsel %vm1333, %v1475, 0
      %v1534 = vsel %vm1333, %v1476, 0
      %v1537 = vsel %vm1333, %v1477, 0
      %v1540 = vsel %vm1333, %v1478, 0
      %1542 = vmatprep.subr.bf16.mxu0 0
      %1543 = vmatpush1.bf16.msra.mxu0 %v1510
      %1544 = vmatprep.subr.bf16.mxu0 0
      %1545 = vmatpush1.bf16.msra.mxu0 %v1511
      %1546 = vmatprep.subr.bf16.mxu0 0
      %1547 = vmatpush1.bf16.msra.mxu0 %v1512
      %1548 = vmatprep.subr.bf16.mxu0 0
      %1549 = vmatpush1.bf16.msra.mxu0 %v1513
      %1550 = vmatprep.subr.bf16.mxu0 0
      %1551 = vmatpush1.bf16.msra.mxu0 0
      %1552 = vmatprep.subr.bf16.mxu0 0
      %1553 = vmatpush1.bf16.msra.mxu0 0
      %1554 = vmatprep.subr.bf16.mxu0 0
      %1555 = vmatpush1.bf16.msra.mxu0 0
      %1556 = vmatprep.subr.bf16.mxu0 0
      %1557 = vmatpush1.bf16.msra.mxu0 0
      %1558 = vmatprep.subr.bf16.mxu0 0
      %1559 = vmatpush1.bf16.msra.mxu0 0
      %1560 = vmatprep.subr.bf16.mxu0 0
      %1561 = vmatpush1.bf16.msra.mxu0 0
      %1562 = vmatprep.subr.bf16.mxu0 0
      %1563 = vmatpush1.bf16.msra.mxu0 0
      %1564 = vmatprep.subr.bf16.mxu0 0
      %1565 = vmatpush1.bf16.msra.mxu0 0
      %1566 = vmatprep.subr.bf16.mxu0 0
      %1567 = vmatpush1.bf16.msra.mxu0 0
      %1568 = vmatprep.subr.bf16.mxu0 0
      %1569 = vmatpush1.bf16.msra.mxu0 0
      %1570 = vmatprep.subr.bf16.mxu0 0
      %1571 = vmatpush1.bf16.msra.mxu0 0
      %1572 = vmatprep.subr.bf16.mxu0 0
      %1573 = vmatpush1.bf16.msra.mxu0 0
      %1574 = vmatprep.mubr.bf16.mxu0 0
      %1575 = vmatmul.mubr.bf16.gmra.mrb[0].mxu0 %v1519
      %v1576 = vpop.f32.mrb[0].mxu0
      %v1577 = vadd.f32 %v1492, %v1576
      %v1578 = vpop.f32.mrb[0].mxu0
      %v1579 = vpop.f32.mrb[0].mxu0
      %v1580 = vadd.f32 %v1492, %v1579
      %v1581 = vpop.f32.mrb[0].mxu0
      %1582 = vmatprep.mubr.bf16.mxu0 0
      %1583 = vmatmul.mubr.bf16.gmra.mrb[0].mxu0 %v1522
      %v1584 = vpop.f32.mrb[0].mxu0
      %v1585 = vadd.f32 %v1492, %v1584
      %v1586 = vpop.f32.mrb[0].mxu0
      %v1587 = vpop.f32.mrb[0].mxu0
      %v1588 = vadd.f32 %v1492, %v1587
      %v1589 = vpop.f32.mrb[0].mxu0
      %1590 = vmatprep.mubr.bf16.mxu0 0
      %1591 = vmatmul.mubr.bf16.gmra.mrb[0].mxu0 %v1525
      %v1592 = vpop.f32.mrb[0].mxu0
      %v1593 = vadd.f32 %v1492, %v1592
      %v1594 = vpop.f32.mrb[0].mxu0
      %v1595 = vpop.f32.mrb[0].mxu0
      %v1596 = vadd.f32 %v1492, %v1595
      %v1597 = vpop.f32.mrb[0].mxu0
      %1598 = vmatprep.mubr.bf16.mxu0 0
      %1599 = vmatmul.mubr.bf16.gmra.mrb[0].mxu0 %v1528
      %v1600 = vpop.f32.mrb[0].mxu0
      %v1601 = vadd.f32 %v1492, %v1600
      %v1602 = vpop.f32.mrb[0].mxu0
      %v1603 = vpop.f32.mrb[0].mxu0
      %v1604 = vadd.f32 %v1492, %v1603
      %v1605 = vpop.f32.mrb[0].mxu0
      %1606 = vmatprep.mubr.bf16.mxu0 0
      %1607 = vmatmul.mubr.bf16.gmra.mrb[0].mxu0 %v1531
      %v1608 = vpop.f32.mrb[0].mxu0
      %v1609 = vadd.f32 %v1492, %v1608
      %v1610 = vpop.f32.mrb[0].mxu0
      %v1611 = vpop.f32.mrb[0].mxu0
      %v1612 = vadd.f32 %v1492, %v1611
      %v1613 = vpop.f32.mrb[0].mxu0
      %1614 = vmatprep.mubr.bf16.mxu0 0
      %1615 = vmatmul.mubr.bf16.gmra.mrb[0].mxu0 %v1534
      %v1616 = vpop.f32.mrb[0].mxu0
      %v1617 = vadd.f32 %v1492, %v1616
      %v1618 = vpop.f32.mrb[0].mxu0
      %v1619 = vpop.f32.mrb[0].mxu0
      %v1620 = vadd.f32 %v1492, %v1619
      %v1621 = vpop.f32.mrb[0].mxu0
      %1622 = vmatprep.mubr.bf16.mxu0 0
      %1623 = vmatmul.mubr.bf16.gmra.mrb[0].mxu0 %v1537
      %v1624 = vpop.f32.mrb[0].mxu0
      %v1625 = vadd.f32 %v1492, %v1624
      %v1626 = vpop.f32.mrb[0].mxu0
      %v1627 = vpop.f32.mrb[0].mxu0
      %v1628 = vadd.f32 %v1492, %v1627
      %v1629 = vpop.f32.mrb[0].mxu0
      %1630 = vmatprep.mubr.bf16.mxu0 0
      %1631 = vmatmul.mubr.bf16.gmra.mrb[0].mxu0 %v1540
      %v1632 = vpop.f32.mrb[0].mxu0
      %v1633 = vadd.f32 %v1492, %v1632
      %v1634 = vpop.f32.mrb[0].mxu0
      %v1635 = vpop.f32.mrb[0].mxu0
      %v1636 = vadd.f32 %v1492, %v1635
      %v1637 = vpop.f32.mrb[0].mxu0
      %1638 = vdwg.mxu0
      %v1639 = vmax.f32 %v1577, 0.0
      %v1640 = vmax.f32 %v1580, 0.0
      %v1641 = vmax.f32 %v1585, 0.0
      %v1642 = vmax.f32 %v1588, 0.0
      %v1643 = vmax.f32 %v1593, 0.0
      %v1644 = vmax.f32 %v1596, 0.0
      %v1645 = vmax.f32 %v1601, 0.0
      %v1646 = vmax.f32 %v1604, 0.0
      %v1647 = vmax.f32 %v1609, 0.0
      %v1648 = vmax.f32 %v1612, 0.0
      %v1649 = vmax.f32 %v1617, 0.0
      %v1650 = vmax.f32 %v1620, 0.0
      %v1651 = vmax.f32 %v1625, 0.0
      %v1652 = vmax.f32 %v1628, 0.0
      %v1653 = vmax.f32 %v1633, 0.0
      %v1654 = vmax.f32 %v1636, 0.0
      %v1655 = vld [vmem:[%s10] sm:$0x1]
      %v1657 = vlaneseq
      %v1658 = vshrl.u32 %v1657, 7
      %v1659 = vsub.s32 0, %v1658
      %v1660 = vrot.slane %v1655, %v1659
      %1661 = vrot.lane.b32.xlu0 %v1660, 8
      %v1662 = vpop.permute.xlu0 %1661
      %v1664 = vmul.f32 %v811, %v1662
      %v1665 = vmul.f32 %v812, %v1662
      %v1666 = vmul.f32 %v813, %v1662
      %v1667 = vmul.f32 %v814, %v1662
      %v1668 = vmul.f32 %v815, %v1662
      %v1669 = vmul.f32 %v816, %v1662
      %v1670 = vmul.f32 %v817, %v1662
      %v1671 = vmul.f32 %v818, %v1662
      %v1672 = vmul.f32 %v819, %v1662
      %v1673 = vmul.f32 %v820, %v1662
      %v1674 = vmul.f32 %v821, %v1662
      %v1675 = vmul.f32 %v822, %v1662
      %v1676 = vmul.f32 %v823, %v1662
      %v1677 = vmul.f32 %v824, %v1662
      %v1678 = vmul.f32 %v825, %v1662
      %v1679 = vmul.f32 %v826, %v1662
      %1696 = vrot.lane.b32.xlu0 %v1664, 120
      %v1697 = vpop.permute.xlu0 %1696
      %1698 = vrot.lane.b32.xlu0 %v1665, 120
      %v1699 = vpop.permute.xlu0 %1698
      %1700 = vrot.lane.b32.xlu0 %v1666, 120
      %v1701 = vpop.permute.xlu0 %1700
      %1702 = vrot.lane.b32.xlu0 %v1667, 120
      %v1703 = vpop.permute.xlu0 %1702
      %1704 = vrot.lane.b32.xlu0 %v1668, 120
      %v1705 = vpop.permute.xlu0 %1704
      %1706 = vrot.lane.b32.xlu0 %v1669, 120
      %v1707 = vpop.permute.xlu0 %1706
      %1708 = vrot.lane.b32.xlu0 %v1670, 120
      %v1709 = vpop.permute.xlu0 %1708
      %1710 = vrot.lane.b32.xlu0 %v1671, 120
      %v1711 = vpop.permute.xlu0 %1710
      %1712 = vrot.lane.b32.xlu0 %v1672, 120
      %v1713 = vpop.permute.xlu0 %1712
      %1714 = vrot.lane.b32.xlu0 %v1673, 120
      %v1715 = vpop.permute.xlu0 %1714
      %1716 = vrot.lane.b32.xlu0 %v1674, 120
      %v1717 = vpop.permute.xlu0 %1716
      %1718 = vrot.lane.b32.xlu0 %v1675, 120
      %v1719 = vpop.permute.xlu0 %1718
      %1720 = vrot.lane.b32.xlu0 %v1676, 120
      %v1721 = vpop.permute.xlu0 %1720
      %1722 = vrot.lane.b32.xlu0 %v1677, 120
      %v1723 = vpop.permute.xlu0 %1722
      %1724 = vrot.lane.b32.xlu0 %v1678, 120
      %v1725 = vpop.permute.xlu0 %1724
      %1726 = vrot.lane.b32.xlu0 %v1679, 120
      %v1727 = vpop.permute.xlu0 %1726
      %v1744 = vsel %vm513, %v1697, 0.0
      %1745 = vadd.xlane.f32.xlu0 %v1744
      %v1746 = vpop.xlane.xlu0 %1745
      %v1747 = vsel %vm513, %v1699, 0.0
      %1748 = vadd.xlane.f32.xlu0 %v1747
      %v1749 = vpop.xlane.xlu0 %1748
      %v1750 = vsel %vm513, %v1701, 0.0
      %1751 = vadd.xlane.f32.xlu0 %v1750
      %v1752 = vpop.xlane.xlu0 %1751
      %v1753 = vsel %vm513, %v1703, 0.0
      %1754 = vadd.xlane.f32.xlu0 %v1753
      %v1755 = vpop.xlane.xlu0 %1754
      %v1756 = vsel %vm513, %v1705, 0.0
      %1757 = vadd.xlane.f32.xlu0 %v1756
      %v1758 = vpop.xlane.xlu0 %1757
      %v1759 = vsel %vm513, %v1707, 0.0
      %1760 = vadd.xlane.f32.xlu0 %v1759
      %v1761 = vpop.xlane.xlu0 %1760
      %v1762 = vsel %vm513, %v1709, 0.0
      %1763 = vadd.xlane.f32.xlu0 %v1762
      %v1764 = vpop.xlane.xlu0 %1763
      %v1765 = vsel %vm513, %v1711, 0.0
      %1766 = vadd.xlane.f32.xlu0 %v1765
      %v1767 = vpop.xlane.xlu0 %1766
      %v1768 = vsel %vm513, %v1713, 0.0
      %1769 = vadd.xlane.f32.xlu0 %v1768
      %v1770 = vpop.xlane.xlu0 %1769
      %v1771 = vsel %vm513, %v1715, 0.0
      %1772 = vadd.xlane.f32.xlu0 %v1771
      %v1773 = vpop.xlane.xlu0 %1772
      %v1774 = vsel %vm513, %v1717, 0.0
      %1775 = vadd.xlane.f32.xlu0 %v1774
      %v1776 = vpop.xlane.xlu0 %1775
      %v1777 = vsel %vm513, %v1719, 0.0
      %1778 = vadd.xlane.f32.xlu0 %v1777
      %v1779 = vpop.xlane.xlu0 %1778
      %v1780 = vsel %vm513, %v1721, 0.0
      %1781 = vadd.xlane.f32.xlu0 %v1780
      %v1782 = vpop.xlane.xlu0 %1781
      %v1783 = vsel %vm513, %v1723, 0.0
      %1784 = vadd.xlane.f32.xlu0 %v1783
      %v1785 = vpop.xlane.xlu0 %1784
      %v1786 = vsel %vm513, %v1725, 0.0
      %1787 = vadd.xlane.f32.xlu0 %v1786
      %v1788 = vpop.xlane.xlu0 %1787
      %v1789 = vsel %vm513, %v1727, 0.0
      %1790 = vadd.xlane.f32.xlu0 %v1789
      %v1791 = vpop.xlane.xlu0 %1790
      %v1792 = vld [vmem:[%s11] sm:$0x1]
      %v1794 = vlaneseq
      %v1795 = vshrl.u32 %v1794, 7
      %v1796 = vsub.s32 0, %v1795
      %v1797 = vrot.slane %v1792, %v1796
      %v1799 = vmul.f32 %v1246, %v1797
      %v1800 = vmul.f32 %v1247, %v1797
      %v1801 = vmul.f32 %v1248, %v1797
      %v1802 = vmul.f32 %v1249, %v1797
      %v1803 = vmul.f32 %v1250, %v1797
      %v1804 = vmul.f32 %v1251, %v1797
      %v1805 = vmul.f32 %v1252, %v1797
      %v1806 = vmul.f32 %v1253, %v1797
      %v1807 = vmul.f32 %v1254, %v1797
      %v1808 = vmul.f32 %v1255, %v1797
      %v1809 = vmul.f32 %v1256, %v1797
      %v1810 = vmul.f32 %v1257, %v1797
      %v1811 = vmul.f32 %v1258, %v1797
      %v1812 = vmul.f32 %v1259, %v1797
      %v1813 = vmul.f32 %v1260, %v1797
      %v1814 = vmul.f32 %v1261, %v1797
      %vm1815 = vcmask 130048
      %v1816 = vsel %vm1815, %v1799, 0.0
      %1817 = vadd.xlane.f32.xlu0 %v1816
      %v1818 = vpop.xlane.xlu0 %1817
      %v1819 = vsel %vm1815, %v1800, 0.0
      %1820 = vadd.xlane.f32.xlu0 %v1819
      %v1821 = vpop.xlane.xlu0 %1820
      %v1822 = vsel %vm1815, %v1801, 0.0
      %1823 = vadd.xlane.f32.xlu0 %v1822
      %v1824 = vpop.xlane.xlu0 %1823
      %v1825 = vsel %vm1815, %v1802, 0.0
      %1826 = vadd.xlane.f32.xlu0 %v1825
      %v1827 = vpop.xlane.xlu0 %1826
      %v1828 = vsel %vm1815, %v1803, 0.0
      %1829 = vadd.xlane.f32.xlu0 %v1828
      %v1830 = vpop.xlane.xlu0 %1829
      %v1831 = vsel %vm1815, %v1804, 0.0
      %1832 = vadd.xlane.f32.xlu0 %v1831
      %v1833 = vpop.xlane.xlu0 %1832
      %v1834 = vsel %vm1815, %v1805, 0.0
      %1835 = vadd.xlane.f32.xlu0 %v1834
      %v1836 = vpop.xlane.xlu0 %1835
      %v1837 = vsel %vm1815, %v1806, 0.0
      %1838 = vadd.xlane.f32.xlu0 %v1837
      %v1839 = vpop.xlane.xlu0 %1838
      %v1840 = vsel %vm1815, %v1807, 0.0
      %1841 = vadd.xlane.f32.xlu0 %v1840
      %v1842 = vpop.xlane.xlu0 %1841
      %v1843 = vsel %vm1815, %v1808, 0.0
      %1844 = vadd.xlane.f32.xlu0 %v1843
      %v1845 = vpop.xlane.xlu0 %1844
      %v1846 = vsel %vm1815, %v1809, 0.0
      %1847 = vadd.xlane.f32.xlu0 %v1846
      %v1848 = vpop.xlane.xlu0 %1847
      %v1849 = vsel %vm1815, %v1810, 0.0
      %1850 = vadd.xlane.f32.xlu0 %v1849
      %v1851 = vpop.xlane.xlu0 %1850
      %v1852 = vsel %vm1815, %v1811, 0.0
      %1853 = vadd.xlane.f32.xlu0 %v1852
      %v1854 = vpop.xlane.xlu0 %1853
      %v1855 = vsel %vm1815, %v1812, 0.0
      %1856 = vadd.xlane.f32.xlu0 %v1855
      %v1857 = vpop.xlane.xlu0 %1856
      %v1858 = vsel %vm1815, %v1813, 0.0
      %1859 = vadd.xlane.f32.xlu0 %v1858
      %v1860 = vpop.xlane.xlu0 %1859
      %v1861 = vsel %vm1815, %v1814, 0.0
      %1862 = vadd.xlane.f32.xlu0 %v1861
      %v1863 = vpop.xlane.xlu0 %1862
      %v1864 = vadd.f32 %v1746, %v1818
      %v1865 = vadd.f32 %v1749, %v1821
      %v1866 = vadd.f32 %v1752, %v1824
      %v1867 = vadd.f32 %v1755, %v1827
      %v1868 = vadd.f32 %v1758, %v1830
      %v1869 = vadd.f32 %v1761, %v1833
      %v1870 = vadd.f32 %v1764, %v1836
      %v1871 = vadd.f32 %v1767, %v1839
      %v1872 = vadd.f32 %v1770, %v1842
      %v1873 = vadd.f32 %v1773, %v1845
      %v1874 = vadd.f32 %v1776, %v1848
      %v1875 = vadd.f32 %v1779, %v1851
      %v1876 = vadd.f32 %v1782, %v1854
      %v1877 = vadd.f32 %v1785, %v1857
      %v1878 = vadd.f32 %v1788, %v1860
      %v1879 = vadd.f32 %v1791, %v1863
      %v1880 = vld [vmem:[%s12] sm:$0x1]
      %v1882 = vlaneseq
      %v1883 = vshrl.u32 %v1882, 7
      %v1884 = vsub.s32 0, %v1883
      %v1885 = vrot.slane %v1880, %v1884
      %v1887 = vmul.f32 %v1639, %v1885
      %v1888 = vmul.f32 %v1640, %v1885
      %v1889 = vmul.f32 %v1641, %v1885
      %v1890 = vmul.f32 %v1642, %v1885
      %v1891 = vmul.f32 %v1643, %v1885
      %v1892 = vmul.f32 %v1644, %v1885
      %v1893 = vmul.f32 %v1645, %v1885
      %v1894 = vmul.f32 %v1646, %v1885
      %v1895 = vmul.f32 %v1647, %v1885
      %v1896 = vmul.f32 %v1648, %v1885
      %v1897 = vmul.f32 %v1649, %v1885
      %v1898 = vmul.f32 %v1650, %v1885
      %v1899 = vmul.f32 %v1651, %v1885
      %v1900 = vmul.f32 %v1652, %v1885
      %v1901 = vmul.f32 %v1653, %v1885
      %v1902 = vmul.f32 %v1654, %v1885
      %v1903 = vsel %vm1333, %v1887, 0.0
      %1904 = vadd.xlane.f32.xlu0 %v1903
      %v1905 = vpop.xlane.xlu0 %1904
      %v1906 = vsel %vm1333, %v1888, 0.0
      %1907 = vadd.xlane.f32.xlu0 %v1906
      %v1908 = vpop.xlane.xlu0 %1907
      %v1909 = vsel %vm1333, %v1889, 0.0
      %1910 = vadd.xlane.f32.xlu0 %v1909
      %v1911 = vpop.xlane.xlu0 %1910
      %v1912 = vsel %vm1333, %v1890, 0.0
      %1913 = vadd.xlane.f32.xlu0 %v1912
      %v1914 = vpop.xlane.xlu0 %1913
      %v1915 = vsel %vm1333, %v1891, 0.0
      %1916 = vadd.xlane.f32.xlu0 %v1915
      %v1917 = vpop.xlane.xlu0 %1916
      %v1918 = vsel %vm1333, %v1892, 0.0
      %1919 = vadd.xlane.f32.xlu0 %v1918
      %v1920 = vpop.xlane.xlu0 %1919
      %v1921 = vsel %vm1333, %v1893, 0.0
      %1922 = vadd.xlane.f32.xlu0 %v1921
      %v1923 = vpop.xlane.xlu0 %1922
      %v1924 = vsel %vm1333, %v1894, 0.0
      %1925 = vadd.xlane.f32.xlu0 %v1924
      %v1926 = vpop.xlane.xlu0 %1925
      %v1927 = vsel %vm1333, %v1895, 0.0
      %1928 = vadd.xlane.f32.xlu0 %v1927
      %v1929 = vpop.xlane.xlu0 %1928
      %v1930 = vsel %vm1333, %v1896, 0.0
      %1931 = vadd.xlane.f32.xlu0 %v1930
      %v1932 = vpop.xlane.xlu0 %1931
      %v1933 = vsel %vm1333, %v1897, 0.0
      %1934 = vadd.xlane.f32.xlu0 %v1933
      %v1935 = vpop.xlane.xlu0 %1934
      %v1936 = vsel %vm1333, %v1898, 0.0
      %1937 = vadd.xlane.f32.xlu0 %v1936
      %v1938 = vpop.xlane.xlu0 %1937
      %v1939 = vsel %vm1333, %v1899, 0.0
      %1940 = vadd.xlane.f32.xlu0 %v1939
      %v1941 = vpop.xlane.xlu0 %1940
      %v1942 = vsel %vm1333, %v1900, 0.0
      %1943 = vadd.xlane.f32.xlu0 %v1942
      %v1944 = vpop.xlane.xlu0 %1943
      %v1945 = vsel %vm1333, %v1901, 0.0
      %1946 = vadd.xlane.f32.xlu0 %v1945
      %v1947 = vpop.xlane.xlu0 %1946
      %v1948 = vsel %vm1333, %v1902, 0.0
      %1949 = vadd.xlane.f32.xlu0 %v1948
      %v1950 = vpop.xlane.xlu0 %1949
      %v1951 = vadd.f32 %v1864, %v1905
      %v1952 = vadd.f32 %v1865, %v1908
      %v1953 = vadd.f32 %v1866, %v1911
      %v1954 = vadd.f32 %v1867, %v1914
      %v1955 = vadd.f32 %v1868, %v1917
      %v1956 = vadd.f32 %v1869, %v1920
      %v1957 = vadd.f32 %v1870, %v1923
      %v1958 = vadd.f32 %v1871, %v1926
      %v1959 = vadd.f32 %v1872, %v1929
      %v1960 = vadd.f32 %v1873, %v1932
      %v1961 = vadd.f32 %v1874, %v1935
      %v1962 = vadd.f32 %v1875, %v1938
      %v1963 = vadd.f32 %v1876, %v1941
      %v1964 = vadd.f32 %v1877, %v1944
      %v1965 = vadd.f32 %v1878, %v1947
      %v1966 = vadd.f32 %v1879, %v1950
      %v1967 = vld [vmem:[#allocation2] sm:$0x1]
      %v1969 = vlaneseq
      %v1970 = vshrl.u32 %v1969, 7
      %v1971 = vsub.s32 0, %v1970
      %v1972 = vrot.slane %v1967, %v1971
      %v1974 = vadd.f32 %v1951, %v1972
      %v1975 = vadd.f32 %v1952, %v1972
      %v1976 = vadd.f32 %v1953, %v1972
      %v1977 = vadd.f32 %v1954, %v1972
      %v1978 = vadd.f32 %v1955, %v1972
      %v1979 = vadd.f32 %v1956, %v1972
      %v1980 = vadd.f32 %v1957, %v1972
      %v1981 = vadd.f32 %v1958, %v1972
      %v1982 = vadd.f32 %v1959, %v1972
      %v1983 = vadd.f32 %v1960, %v1972
      %v1984 = vadd.f32 %v1961, %v1972
      %v1985 = vadd.f32 %v1962, %v1972
      %v1986 = vadd.f32 %v1963, %v1972
      %v1987 = vadd.f32 %v1964, %v1972
      %v1988 = vadd.f32 %v1965, %v1972
      %v1989 = vadd.f32 %v1966, %v1972
      %vm1990 = vcmask 7168
      %1991 = vst.msk [vmem:[%s493] sm:$0xff] %vm1990, %v1974
      %1992 = vst.msk [vmem:[%s493 + $0x8] sm:$0xff] %vm1990, %v1975
      %1993 = vst.msk [vmem:[%s493 + $0x10] sm:$0xff] %vm1990, %v1976
      %1994 = vst.msk [vmem:[%s493 + $0x18] sm:$0xff] %vm1990, %v1977
      %1995 = vst.msk [vmem:[%s493 + $0x20] sm:$0xff] %vm1990, %v1978
      %1996 = vst.msk [vmem:[%s493 + $0x28] sm:$0xff] %vm1990, %v1979
      %1997 = vst.msk [vmem:[%s493 + $0x30] sm:$0xff] %vm1990, %v1980
      %1998 = vst.msk [vmem:[%s493 + $0x38] sm:$0xff] %vm1990, %v1981
      %1999 = vst.msk [vmem:[%s493 + $0x40] sm:$0xff] %vm1990, %v1982
      %2000 = vst.msk [vmem:[%s493 + $0x48] sm:$0xff] %vm1990, %v1983
      %2001 = vst.msk [vmem:[%s493 + $0x50] sm:$0xff] %vm1990, %v1984
      %2002 = vst.msk [vmem:[%s493 + $0x58] sm:$0xff] %vm1990, %v1985
      %2003 = vst.msk [vmem:[%s493 + $0x60] sm:$0xff] %vm1990, %v1986
      %2004 = vst.msk [vmem:[%s493 + $0x68] sm:$0xff] %vm1990, %v1987
      %2005 = vst.msk [vmem:[%s493 + $0x70] sm:$0xff] %vm1990, %v1988
      %2006 = vst.msk [vmem:[%s493 + $0x78] sm:$0xff] %vm1990, %v1989
      %s2007 = smul.u32 16, %s27
      %p2008 = scmp.lt.s32.totalorder %s2007, 31
      %s2009 = scalar_select %p2008, %s2007, 31
      %s2010 = smul.addr %s2009, 8
      %s2011 = scalar_lea.vmem %s14, %s2010
      // Predicated region
      $region77: #{tpu_custom_call.1} parent=75 // pred_check
        %p2012 = pneg %p349
      $region78: #{tpu_custom_call.1} parent=75 // pred_check_branch
        %2014 = sbr.rel (%p2012) target = $region80
      $region79: #{tpu_custom_call.1} parent=75 // pred_region
        %s2015 = smul.u32 16, %s27
      $region80: #{tpu_custom_call.1} parent=75 // pred_fallthru
        _
    $region76: #{tpu_custom_call.1} parent=5 // pred_fallthru
      _
    %p2016 = scmp.le.s32.totalorder 2, %s22
    // Predicated region
    $region81: #{tpu_custom_call.1} parent=5 // pred_check
      %p2017 = pneg %p2016
    $region82: #{tpu_custom_call.1} parent=5 // pred_check_branch
      %2019 = sbr.rel (%p2017) target = $region84
    $region83: #{tpu_custom_call.1} parent=5 // pred_region
      %s2020 = ssub.s32 %s22, 2
      // Predicated region
      $region85: #{tpu_custom_call.1} parent=83 // pred_check
        %p2021 = pneg %p355
      $region86: #{tpu_custom_call.1} parent=83 // pred_check_branch
        %2023 = sbr.rel (%p2021) target = $region88
      $region87: #{tpu_custom_call.1} parent=83 // pred_region
        %s2024 = smul.u32 16, %s28
        %p2025 = scmp.lt.s32.totalorder %s2024, 31
        %s2026 = scalar_select %p2025, %s2024, 31
        %s2027 = smul.addr %s2026, 8
        %s2028 = scalar_lea.vmem %s14, %s2027
      $region88: #{tpu_custom_call.1} parent=83 // pred_fallthru
        _
    $region84: #{tpu_custom_call.1} parent=5 // pred_fallthru
      _
  $region6: #{tpu_custom_call.1} parent=0 // loop_footer
    %s26 = sadd.s32 1, %s22
  $region7: #{tpu_custom_call.1} parent=0 // loop_footer_branch
    %21 = sbr.rel target = $region3
  $region8: #{tpu_custom_call.1} parent=0 // loop_exit
    _

</llo_original>
